<compile_context>
chip_gen: v5e
topology: v5e:2x2
jax: 0.10.0
libtpu: 0.0.40
codegen_flags: <defaults>
</compile_context>

<pallas_src>
import math
import functools

import jax
import jax.numpy as jnp
from jax.experimental import pallas as pl
from jax.experimental.pallas import tpu as pltpu


def _round_up(v, m):
    return ((v + m - 1) // m) * m


def kan_linear_kernel(x_ref, grid_ref, recip_ref, base_w_ref, spline_w_ref,
                      out_ref, silu_scratch, bases_scratch,
                      *, grid_size, spline_order, i_pad, matmul_dtype):
    n_pts = grid_size + 2 * spline_order + 1
    n_basis = grid_size + spline_order

    # ---- batch-only work: compute once per batch tile (o == 0), reuse for the
    #      remaining out-feature tiles via VMEM scratch -------------------------
    @pl.when(pl.program_id(1) == 0)
    def _():
        x = x_ref[...].astype(jnp.float32)              # (TB, I_pad)
        g = grid_ref[...].astype(jnp.float32)           # (n_pts, I_pad)
        # Hoist knot rows once (JAX does not CSE broadcast_in_dim).
        g_rows = [g[j:j + 1, :] for j in range(n_pts)]

        # SiLU(x), cached in matmul_dtype for the base matmul.
        silu_scratch[...] = (x * jax.nn.sigmoid(x)).astype(matmul_dtype)

        # Degree-0 bases via shared comparisons: cmp[j] & ~cmp[j+1].
        cmp = [x >= g_rows[j] for j in range(n_pts)]
        bases = [
            jnp.logical_and(cmp[j], jnp.logical_not(cmp[j + 1])).astype(jnp.float32)
            for j in range(n_pts - 1)
        ]
        d = [x - g_rows[j] for j in range(n_pts)]       # (TB, I_pad) diffs

        if spline_order == 0:
            for j in range(n_basis):
                bases_scratch[:, j * i_pad:(j + 1) * i_pad] = (
                    bases[j].astype(matmul_dtype))
        else:
            # Host-precomputed knot-span reciprocals; row(k, j) = offs[k] + j
            # holds 1 / (g[j+k] - g[j]).
            recip = recip_ref[...].astype(jnp.float32)
            offs, off = {}, 0
            for k in range(1, spline_order + 1):
                offs[k] = off
                off += n_pts - k

            for k in range(1, spline_order + 1):
                new_bases = []
                for j in range(len(bases) - 1):
                    r = offs[k] + j
                    inv_a = recip[r:r + 1, :]            # 1/(g[j+k]   - g[j])
                    inv_b = recip[r + 1:r + 2, :]        # 1/(g[j+k+1] - g[j+1])
                    left = d[j] * inv_a * bases[j]
                    right = (-d[j + k + 1]) * inv_b * bases[j + 1]
                    nb = left + right
                    if k == spline_order:
                        # Write final-degree basis straight into its lane slice
                        # (eliminates the concatenate copy).
                        bases_scratch[:, j * i_pad:(j + 1) * i_pad] = (
                            nb.astype(matmul_dtype))
                    new_bases.append(nb)
                bases = new_bases

    # ---- two MXU contractions per (b, o) tile --------------------------------
    base_out = jax.lax.dot_general(
        silu_scratch[...], base_w_ref[...],
        (((1,), (1,)), ((), ())),
        preferred_element_type=jnp.float32)              # (TB, TO)

    spline_out = jax.lax.dot_general(
        bases_scratch[...], spline_w_ref[...],
        (((1,), (1,)), ((), ())),
        preferred_element_type=jnp.float32)              # (TB, TO)

    out_ref[...] = (base_out + spline_out).astype(out_ref.dtype)


def kan_linear(x, grid, base_weight, spline_weight, spline_scaler,
               *, grid_size, spline_order, matmul_dtype=jnp.bfloat16):
    """Forward pass of KANLinear.  Shapes follow the PyTorch module:
       x (B, I), grid (I, n_pts), base_weight (O, I),
       spline_weight (O, I, n_basis), spline_scaler (O, I)."""
    B, I = x.shape
    O = base_weight.shape[0]
    n_basis = grid_size + spline_order
    n_pts = grid_size + 2 * spline_order + 1
    f32 = jnp.float32
    wb = jnp.dtype(matmul_dtype).itemsize

    # ---- lane-dense padding / tile selection ----
    I_pad = max(128, _round_up(I, 128))
    O_pad0 = max(128, _round_up(O, 128))
    TO = min(O_pad0, 256)

    B_pad8 = _round_up(B, 8)
    if I_pad <= 128:
        tb_cap = 256
    elif I_pad <= 512:
        tb_cap = 128
    else:
        tb_cap = 64
    TB = _round_up(min(B_pad8, tb_cap), 8)

    n_recip = sum(n_pts - k for k in range(1, spline_order + 1))
    n_recip_eff = max(n_recip, 1)

    def vmem_estimate(tb, to):
        return (
            2 * tb * I_pad * 4                       # x tile (double-buffered)
            + 2 * n_pts * I_pad * 4                  # knots
            + 2 * n_recip_eff * I_pad * 4            # reciprocals
            + 2 * to * I_pad * wb                    # base weight
            + 2 * to * n_basis * I_pad * wb          # spline slab
            + 2 * tb * to * 4                        # output tile
            + tb * I_pad * wb                        # silu scratch
            + tb * n_basis * I_pad * wb              # bases scratch
            + (2 * n_pts + n_basis + 4) * tb * I_pad * 4)  # live recursion f32

    # Keep the working set <= ~40 MiB so it is also v7x (64 MiB VMEM) safe:
    # shrink TO to 128 first, then TB.
    budget = 40 * 2**20
    while vmem_estimate(TB, TO) > budget and TO > 128:
        TO //= 2
    while vmem_estimate(TB, TO) > budget and TB > 8:
        TB = max(8, _round_up(TB // 2, 8))

    O_pad = _round_up(O_pad0, TO)
    B_pad = _round_up(B_pad8, TB)
    vmem_limit = int(min(48 * 2**20, max(32 * 2**20, 2 * vmem_estimate(TB, TO))))

    # ---- host-side operand preparation ----
    # x: zero-pad batch + features (padded features hit zero weight columns).
    x_p = jnp.zeros((B_pad, I_pad), x.dtype).at[:B, :I].set(x)

    # knots: (I, n_pts) -> (n_pts, I); pad feature columns with a VALID
    # (strictly increasing) knot vector so padded-lane spans are never zero.
    grid_t = jnp.asarray(grid, f32).T                              # (n_pts, I)
    if I_pad > I:
        pad_knots = jnp.tile(grid_t[:, -1:], (1, I_pad - I))
        grid_tp = jnp.concatenate([grid_t, pad_knots], axis=1)
    else:
        grid_tp = grid_t

    # Knot-span reciprocals, row(k, j) = 1 / (g[j+k] - g[j]).
    if n_recip > 0:
        recip = jnp.concatenate(
            [1.0 / (grid_tp[k:, :] - grid_tp[:n_pts - k, :])
             for k in range(1, spline_order + 1)], axis=0)          # (n_recip, I_pad)
    else:
        recip = jnp.ones((1, I_pad), f32)

    # base weight (O, I) -> (O_pad, I_pad), pre-cast to matmul_dtype.
    bw_p = (jnp.zeros((O_pad, I_pad), f32)
            .at[:O, :I].set(base_weight)
            .astype(matmul_dtype))

    # spline weight with the standalone scaler FOLDED IN on the host:
    # (O, I, nb) * scaler -> (O, nb, I) -> flattened (O_pad, nb*I_pad) in
    # matmul_dtype; K layout [o, j*I_pad + i] matches the in-kernel scratch.
    scaled_sw = (jnp.asarray(spline_weight, f32)
                 * jnp.asarray(spline_scaler, f32)[..., None])      # (O, I, nb)
    sw_t = jnp.transpose(scaled_sw, (0, 2, 1))                      # (O, nb, I)
    sw_p = (jnp.zeros((O_pad, n_basis, I_pad), f32)
            .at[:O, :, :I].set(sw_t)
            .reshape(O_pad, n_basis * I_pad)
            .astype(matmul_dtype))

    # ---- cost estimate (advisory, lets XLA overlap the host-side prep) ----
    flops = (2 * B_pad * O_pad * I_pad                      # base matmul
             + 2 * B_pad * O_pad * n_basis * I_pad          # spline matmul
             + 8 * spline_order * n_pts * B_pad * I_pad)    # recursion (rough)
    bytes_accessed = (x_p.size * x_p.dtype.itemsize
                      + grid_tp.size * 4 + recip.size * 4
                      + (B_pad // TB) * (bw_p.size + sw_p.size) * wb
                      + B_pad * O_pad * x.dtype.itemsize)
    cost = pl.CostEstimate(flops=int(flops),
                           transcendentals=int(B_pad * I_pad),
                           bytes_accessed=int(bytes_accessed))

    kernel = functools.partial(
        kan_linear_kernel, grid_size=grid_size, spline_order=spline_order,
        i_pad=I_pad, matmul_dtype=matmul_dtype)

    n_recip_rows = recip.shape[0]

    out_padded = pl.pallas_call(
        kernel,
        out_shape=jax.ShapeDtypeStruct((B_pad, O_pad), x.dtype),
        grid=(B_pad // TB, O_pad // TO),
        in_specs=[
            pl.BlockSpec((TB, I_pad), lambda b, o: (b, 0)),
            pl.BlockSpec((n_pts, I_pad), lambda b, o: (0, 0)),
            pl.BlockSpec((n_recip_rows, I_pad), lambda b, o: (0, 0)),
            pl.BlockSpec((TO, I_pad), lambda b, o: (o, 0)),
            pl.BlockSpec((TO, n_basis * I_pad), lambda b, o: (o, 0)),
        ],
        out_specs=pl.BlockSpec((TB, TO), lambda b, o: (b, o)),
        scratch_shapes=[
            pltpu.VMEM((TB, I_pad), matmul_dtype),             # cached SiLU(x)
            pltpu.VMEM((TB, n_basis * I_pad), matmul_dtype),   # cached bases slab
        ],
        compiler_params=pltpu.CompilerParams(
            dimension_semantics=("parallel", "arbitrary"),
            vmem_limit_bytes=vmem_limit),
        cost_estimate=cost,
    )(x_p, grid_tp, recip, bw_p, sw_p)

    return out_padded[:B, :O]


# ---------------- pure-JAX reference (mirrors the PyTorch forward) -----------
def b_splines_ref(x, grid, spline_order):
    x_ = x[:, :, None]
    bases = jnp.logical_and(x_ >= grid[:, :-1], x_ < grid[:, 1:]).astype(x.dtype)
    for k in range(1, spline_order + 1):
        bases = ((x_ - grid[:, :-(k + 1)])
                 / (grid[:, k:-1] - grid[:, :-(k + 1)]) * bases[:, :, :-1]
                 + (grid[:, k + 1:] - x_)
                 / (grid[:, k + 1:] - grid[:, 1:-k]) * bases[:, :, 1:])
    return bases


def kan_linear_ref(x, grid, base_weight, spline_weight, spline_scaler,
                   *, grid_size, spline_order):
    silu = x * jax.nn.sigmoid(x)
    base_out = silu @ base_weight.T
    bases = b_splines_ref(x, grid, spline_order)               # (B, I, nb)
    scaled_sw = spline_weight * spline_scaler[..., None]       # (O, I, nb)
    spline_out = bases.reshape(x.shape[0], -1) @ scaled_sw.reshape(
        base_weight.shape[0], -1).T
    return base_out + spline_out


# ---------------- deterministic parameter construction -----------------------
def kaiming_uniform(key, shape, a):
    fan_in = shape[1]
    gain = math.sqrt(2.0 / (1.0 + a * a))
    bound = gain * math.sqrt(3.0 / fan_in)
    return jax.random.uniform(key, shape, jnp.float32, -bound, bound)


if __name__ == "__main__":
    in_features, out_features = 32, 16
    grid_size, spline_order = 5, 3
    scale_noise, scale_base, scale_spline = 0.1, 1.0, 1.0
    grid_range = (-1.0, 1.0)
    batch = 8

    key = jax.random.PRNGKey(0)
    k_x, k_bw, k_sw, k_sc = jax.random.split(key, 4)

    # grid buffer, shape (in_features, grid_size + 2*spline_order + 1)
    h = (grid_range[1] - grid_range[0]) / grid_size
    grid_1d = (jnp.arange(-spline_order, grid_size + spline_order + 1,
                          dtype=jnp.float32) * h + grid_range[0])
    grid = jnp.tile(grid_1d[None, :], (in_features, 1))

    base_weight = kaiming_uniform(k_bw, (out_features, in_features),
                                  a=math.sqrt(5) * scale_base)
    # TODO(synk): PyTorch initializes spline_weight via curve2coeff (lstsq) on
    # noise; lstsq has no clean Pallas equivalent, so use deterministic small
    # uniform noise of the same magnitude instead (init-only, not forward).
    spline_weight = (jax.random.uniform(
        k_sw, (out_features, in_features, grid_size + spline_order),
        jnp.float32, -0.5, 0.5) * scale_noise / grid_size)
    spline_scaler = kaiming_uniform(k_sc, (out_features, in_features),
                                    a=math.sqrt(5) * scale_spline)

    x = jax.random.uniform(k_x, (batch, in_features), jnp.float32, -1.0, 1.0)

    ref = kan_linear_ref(x, grid, base_weight, spline_weight, spline_scaler,
                         grid_size=grid_size, spline_order=spline_order)

    # f32 matmul path: tight check against the reference.
    out_f32 = kan_linear(x, grid, base_weight, spline_weight, spline_scaler,
                         grid_size=grid_size, spline_order=spline_order,
                         matmul_dtype=jnp.float32)
    out_f32 = jax.block_until_ready(out_f32)
    assert out_f32.shape == (batch, out_features)
    assert jnp.allclose(out_f32, ref, rtol=1e-5, atol=2e-5), (
        f"f32 max abs err {jnp.max(jnp.abs(out_f32 - ref))}")

    # Default bf16 matmul path (f32 accumulation): looser tolerance.
    out_bf16 = kan_linear(x, grid, base_weight, spline_weight, spline_scaler,
                          grid_size=grid_size, spline_order=spline_order)
    out_bf16 = jax.block_until_ready(out_bf16)
    assert out_bf16.shape == (batch, out_features)
    assert jnp.allclose(out_bf16, ref, rtol=2e-2, atol=1e-2), (
        f"bf16 max abs err {jnp.max(jnp.abs(out_bf16 - ref))}")

    print("KERNEL_OK")
</pallas_src>

<mosaic_0001>
module attributes {stable_mosaic.version = 11 : i64} {
  func.func @kan_linear_kernel(%arg0: i32, %arg1: i32, %arg2: memref<8x128xf32, #tpu.memory_space<vmem>>, %arg3: memref<12x128xf32, #tpu.memory_space<vmem>>, %arg4: memref<30x128xf32, #tpu.memory_space<vmem>>, %arg5: memref<128x128xf32, #tpu.memory_space<vmem>>, %arg6: memref<128x1024xf32, #tpu.memory_space<vmem>>, %arg7: memref<8x128xf32, #tpu.memory_space<vmem>>, %arg8: memref<8x128xf32, #tpu.memory_space<vmem>>, %arg9: memref<8x1024xf32, #tpu.memory_space<vmem>>) attributes {dimension_semantics = [#tpu.dimension_semantics<parallel>, #tpu.dimension_semantics<arbitrary>], iteration_bounds = array<i64: 1, 1>, scalar_prefetch = 0 : i64, scratch_operands = 2 : i64, tpu.core_type = #tpu.core_type<tc>, window_params = [{transform_indices = @transform_0, window_bounds = array<i64: 8, 128>}, {pipeline_mode = #tpu.pipeline_mode<synchronous>, transform_indices = @transform_1, window_bounds = array<i64: 12, 128>}, {pipeline_mode = #tpu.pipeline_mode<synchronous>, transform_indices = @transform_2, window_bounds = array<i64: 30, 128>}, {transform_indices = @transform_3, window_bounds = array<i64: 128, 128>}, {transform_indices = @transform_4, window_bounds = array<i64: 128, 1024>}, {transform_indices = @transform_5, window_bounds = array<i64: 8, 128>}]} {
    %c0_i32 = arith.constant 0 : i32
    %0 = arith.cmpi eq, %arg1, %c0_i32 : i32
    %1 = arith.extui %0 : i1 to i32
    %c0_i32_0 = arith.constant 0 : i32
    %2 = arith.cmpi ne, %1, %c0_i32_0 : i32
    scf.if %2 {
      %c0_11 = arith.constant 0 : index
      %c0_12 = arith.constant 0 : index
      %11 = vector.load %arg2[%c0_11, %c0_12] : memref<8x128xf32, #tpu.memory_space<vmem>>, vector<8x128xf32>
      %c0_13 = arith.constant 0 : index
      %c0_14 = arith.constant 0 : index
      %12 = vector.load %arg3[%c0_13, %c0_14] : memref<12x128xf32, #tpu.memory_space<vmem>>, vector<12x128xf32>
      %13 = vector.extract_strided_slice %12 {offsets = [0, 0], sizes = [1, 128], strides = [1, 1]} : vector<12x128xf32> to vector<1x128xf32>
      %14 = vector.extract_strided_slice %12 {offsets = [1, 0], sizes = [1, 128], strides = [1, 1]} : vector<12x128xf32> to vector<1x128xf32>
      %15 = vector.extract_strided_slice %12 {offsets = [2, 0], sizes = [1, 128], strides = [1, 1]} : vector<12x128xf32> to vector<1x128xf32>
      %16 = vector.extract_strided_slice %12 {offsets = [3, 0], sizes = [1, 128], strides = [1, 1]} : vector<12x128xf32> to vector<1x128xf32>
      %17 = vector.extract_strided_slice %12 {offsets = [4, 0], sizes = [1, 128], strides = [1, 1]} : vector<12x128xf32> to vector<1x128xf32>
      %18 = vector.extract_strided_slice %12 {offsets = [5, 0], sizes = [1, 128], strides = [1, 1]} : vector<12x128xf32> to vector<1x128xf32>
      %19 = vector.extract_strided_slice %12 {offsets = [6, 0], sizes = [1, 128], strides = [1, 1]} : vector<12x128xf32> to vector<1x128xf32>
      %20 = vector.extract_strided_slice %12 {offsets = [7, 0], sizes = [1, 128], strides = [1, 1]} : vector<12x128xf32> to vector<1x128xf32>
      %21 = vector.extract_strided_slice %12 {offsets = [8, 0], sizes = [1, 128], strides = [1, 1]} : vector<12x128xf32> to vector<1x128xf32>
      %22 = vector.extract_strided_slice %12 {offsets = [9, 0], sizes = [1, 128], strides = [1, 1]} : vector<12x128xf32> to vector<1x128xf32>
      %23 = vector.extract_strided_slice %12 {offsets = [10, 0], sizes = [1, 128], strides = [1, 1]} : vector<12x128xf32> to vector<1x128xf32>
      %24 = vector.extract_strided_slice %12 {offsets = [11, 0], sizes = [1, 128], strides = [1, 1]} : vector<12x128xf32> to vector<1x128xf32>
      %25 = arith.negf %11 : vector<8x128xf32>
      %26 = math.exp %25 : vector<8x128xf32>
      %cst_15 = arith.constant 1.000000e+00 : f32
      %27 = vector.broadcast %cst_15 : f32 to vector<8x128xf32>
      %28 = arith.addf %27, %26 : vector<8x128xf32>
      %29 = arith.divf %27, %28 : vector<8x128xf32>
      %30 = arith.mulf %11, %29 : vector<8x128xf32>
      %c0_16 = arith.constant 0 : index
      %c0_17 = arith.constant 0 : index
      %31 = vector.load %arg8[%c0_16, %c0_17] : memref<8x128xf32, #tpu.memory_space<vmem>>, vector<8x128xf32>
      tpu.vector_store %arg8[%c0_16, %c0_17], %30 {strides = array<i32>} : memref<8x128xf32, #tpu.memory_space<vmem>>, vector<8x128xf32>,
      %32 = vector.broadcast %13 : vector<1x128xf32> to vector<8x128xf32>
      %33 = arith.cmpf oge, %11, %32 : vector<8x128xf32>
      %34 = vector.broadcast %14 : vector<1x128xf32> to vector<8x128xf32>
      %35 = arith.cmpf oge, %11, %34 : vector<8x128xf32>
      %36 = vector.broadcast %15 : vector<1x128xf32> to vector<8x128xf32>
      %37 = arith.cmpf oge, %11, %36 : vector<8x128xf32>
      %38 = vector.broadcast %16 : vector<1x128xf32> to vector<8x128xf32>
      %39 = arith.cmpf oge, %11, %38 : vector<8x128xf32>
      %40 = vector.broadcast %17 : vector<1x128xf32> to vector<8x128xf32>
      %41 = arith.cmpf oge, %11, %40 : vector<8x128xf32>
      %42 = vector.broadcast %18 : vector<1x128xf32> to vector<8x128xf32>
      %43 = arith.cmpf oge, %11, %42 : vector<8x128xf32>
      %44 = vector.broadcast %19 : vector<1x128xf32> to vector<8x128xf32>
      %45 = arith.cmpf oge, %11, %44 : vector<8x128xf32>
      %46 = vector.broadcast %20 : vector<1x128xf32> to vector<8x128xf32>
      %47 = arith.cmpf oge, %11, %46 : vector<8x128xf32>
      %48 = vector.broadcast %21 : vector<1x128xf32> to vector<8x128xf32>
      %49 = arith.cmpf oge, %11, %48 : vector<8x128xf32>
      %50 = vector.broadcast %22 : vector<1x128xf32> to vector<8x128xf32>
      %51 = arith.cmpf oge, %11, %50 : vector<8x128xf32>
      %52 = vector.broadcast %23 : vector<1x128xf32> to vector<8x128xf32>
      %53 = arith.cmpf oge, %11, %52 : vector<8x128xf32>
      %54 = vector.broadcast %24 : vector<1x128xf32> to vector<8x128xf32>
      %55 = arith.cmpf oge, %11, %54 : vector<8x128xf32>
      %cst_18 = arith.constant dense<true> : vector<8x128xi1>
      %56 = arith.xori %35, %cst_18 : vector<8x128xi1>
      %57 = arith.andi %33, %56 : vector<8x128xi1>
      %58 = arith.extui %57 : vector<8x128xi1> to vector<8x128xi32>
      %59 = arith.sitofp %58 : vector<8x128xi32> to vector<8x128xf32>
      %cst_19 = arith.constant dense<true> : vector<8x128xi1>
      %60 = arith.xori %37, %cst_19 : vector<8x128xi1>
      %61 = arith.andi %35, %60 : vector<8x128xi1>
      %62 = arith.extui %61 : vector<8x128xi1> to vector<8x128xi32>
      %63 = arith.sitofp %62 : vector<8x128xi32> to vector<8x128xf32>
      %cst_20 = arith.constant dense<true> : vector<8x128xi1>
      %64 = arith.xori %39, %cst_20 : vector<8x128xi1>
      %65 = arith.andi %37, %64 : vector<8x128xi1>
      %66 = arith.extui %65 : vector<8x128xi1> to vector<8x128xi32>
      %67 = arith.sitofp %66 : vector<8x128xi32> to vector<8x128xf32>
      %cst_21 = arith.constant dense<true> : vector<8x128xi1>
      %68 = arith.xori %41, %cst_21 : vector<8x128xi1>
      %69 = arith.andi %39, %68 : vector<8x128xi1>
      %70 = arith.extui %69 : vector<8x128xi1> to vector<8x128xi32>
      %71 = arith.sitofp %70 : vector<8x128xi32> to vector<8x128xf32>
      %cst_22 = arith.constant dense<true> : vector<8x128xi1>
      %72 = arith.xori %43, %cst_22 : vector<8x128xi1>
      %73 = arith.andi %41, %72 : vector<8x128xi1>
      %74 = arith.extui %73 : vector<8x128xi1> to vector<8x128xi32>
      %75 = arith.sitofp %74 : vector<8x128xi32> to vector<8x128xf32>
      %cst_23 = arith.constant dense<true> : vector<8x128xi1>
      %76 = arith.xori %45, %cst_23 : vector<8x128xi1>
      %77 = arith.andi %43, %76 : vector<8x128xi1>
      %78 = arith.extui %77 : vector<8x128xi1> to vector<8x128xi32>
      %79 = arith.sitofp %78 : vector<8x128xi32> to vector<8x128xf32>
      %cst_24 = arith.constant dense<true> : vector<8x128xi1>
      %80 = arith.xori %47, %cst_24 : vector<8x128xi1>
      %81 = arith.andi %45, %80 : vector<8x128xi1>
      %82 = arith.extui %81 : vector<8x128xi1> to vector<8x128xi32>
      %83 = arith.sitofp %82 : vector<8x128xi32> to vector<8x128xf32>
      %cst_25 = arith.constant dense<true> : vector<8x128xi1>
      %84 = arith.xori %49, %cst_25 : vector<8x128xi1>
      %85 = arith.andi %47, %84 : vector<8x128xi1>
      %86 = arith.extui %85 : vector<8x128xi1> to vector<8x128xi32>
      %87 = arith.sitofp %86 : vector<8x128xi32> to vector<8x128xf32>
      %cst_26 = arith.constant dense<true> : vector<8x128xi1>
      %88 = arith.xori %51, %cst_26 : vector<8x128xi1>
      %89 = arith.andi %49, %88 : vector<8x128xi1>
      %90 = arith.extui %89 : vector<8x128xi1> to vector<8x128xi32>
      %91 = arith.sitofp %90 : vector<8x128xi32> to vector<8x128xf32>
      %cst_27 = arith.constant dense<true> : vector<8x128xi1>
      %92 = arith.xori %53, %cst_27 : vector<8x128xi1>
      %93 = arith.andi %51, %92 : vector<8x128xi1>
      %94 = arith.extui %93 : vector<8x128xi1> to vector<8x128xi32>
      %95 = arith.sitofp %94 : vector<8x128xi32> to vector<8x128xf32>
      %cst_28 = arith.constant dense<true> : vector<8x128xi1>
      %96 = arith.xori %55, %cst_28 : vector<8x128xi1>
      %97 = arith.andi %53, %96 : vector<8x128xi1>
      %98 = arith.extui %97 : vector<8x128xi1> to vector<8x128xi32>
      %99 = arith.sitofp %98 : vector<8x128xi32> to vector<8x128xf32>
      %100 = vector.broadcast %13 : vector<1x128xf32> to vector<8x128xf32>
      %101 = arith.subf %11, %100 : vector<8x128xf32>
      %102 = vector.broadcast %14 : vector<1x128xf32> to vector<8x128xf32>
      %103 = arith.subf %11, %102 : vector<8x128xf32>
      %104 = vector.broadcast %15 : vector<1x128xf32> to vector<8x128xf32>
      %105 = arith.subf %11, %104 : vector<8x128xf32>
      %106 = vector.broadcast %16 : vector<1x128xf32> to vector<8x128xf32>
      %107 = arith.subf %11, %106 : vector<8x128xf32>
      %108 = vector.broadcast %17 : vector<1x128xf32> to vector<8x128xf32>
      %109 = arith.subf %11, %108 : vector<8x128xf32>
      %110 = vector.broadcast %18 : vector<1x128xf32> to vector<8x128xf32>
      %111 = arith.subf %11, %110 : vector<8x128xf32>
      %112 = vector.broadcast %19 : vector<1x128xf32> to vector<8x128xf32>
      %113 = arith.subf %11, %112 : vector<8x128xf32>
      %114 = vector.broadcast %20 : vector<1x128xf32> to vector<8x128xf32>
      %115 = arith.subf %11, %114 : vector<8x128xf32>
      %116 = vector.broadcast %21 : vector<1x128xf32> to vector<8x128xf32>
      %117 = arith.subf %11, %116 : vector<8x128xf32>
      %118 = vector.broadcast %22 : vector<1x128xf32> to vector<8x128xf32>
      %119 = arith.subf %11, %118 : vector<8x128xf32>
      %120 = vector.broadcast %23 : vector<1x128xf32> to vector<8x128xf32>
      %121 = arith.subf %11, %120 : vector<8x128xf32>
      %122 = vector.broadcast %24 : vector<1x128xf32> to vector<8x128xf32>
      %123 = arith.subf %11, %122 : vector<8x128xf32>
      %c0_29 = arith.constant 0 : index
      %c0_30 = arith.constant 0 : index
      %124 = vector.load %arg4[%c0_29, %c0_30] : memref<30x128xf32, #tpu.memory_space<vmem>>, vector<30x128xf32>
      %125 = vector.extract_strided_slice %124 {offsets = [0, 0], sizes = [1, 128], strides = [1, 1]} : vector<30x128xf32> to vector<1x128xf32>
      %126 = vector.extract_strided_slice %124 {offsets = [1, 0], sizes = [1, 128], strides = [1, 1]} : vector<30x128xf32> to vector<1x128xf32>
      %127 = vector.broadcast %125 : vector<1x128xf32> to vector<8x128xf32>
      %128 = arith.mulf %101, %127 : vector<8x128xf32>
      %129 = arith.mulf %128, %59 : vector<8x128xf32>
      %cst_31 = arith.constant 0.000000e+00 : f32
      %130 = vector.broadcast %cst_31 : f32 to vector<8x128xf32>
      %131 = arith.subf %130, %105 : vector<8x128xf32>
      %132 = vector.broadcast %126 : vector<1x128xf32> to vector<8x128xf32>
      %133 = arith.mulf %131, %132 : vector<8x128xf32>
      %134 = arith.mulf %133, %63 : vector<8x128xf32>
      %135 = arith.addf %129, %134 : vector<8x128xf32>
      %136 = vector.extract_strided_slice %124 {offsets = [1, 0], sizes = [1, 128], strides = [1, 1]} : vector<30x128xf32> to vector<1x128xf32>
      %137 = vector.extract_strided_slice %124 {offsets = [2, 0], sizes = [1, 128], strides = [1, 1]} : vector<30x128xf32> to vector<1x128xf32>
      %138 = vector.broadcast %136 : vector<1x128xf32> to vector<8x128xf32>
      %139 = arith.mulf %103, %138 : vector<8x128xf32>
      %140 = arith.mulf %139, %63 : vector<8x128xf32>
      %cst_32 = arith.constant 0.000000e+00 : f32
      %141 = vector.broadcast %cst_32 : f32 to vector<8x128xf32>
      %142 = arith.subf %141, %107 : vector<8x128xf32>
      %143 = vector.broadcast %137 : vector<1x128xf32> to vector<8x128xf32>
      %144 = arith.mulf %142, %143 : vector<8x128xf32>
      %145 = arith.mulf %144, %67 : vector<8x128xf32>
      %146 = arith.addf %140, %145 : vector<8x128xf32>
      %147 = vector.extract_strided_slice %124 {offsets = [2, 0], sizes = [1, 128], strides = [1, 1]} : vector<30x128xf32> to vector<1x128xf32>
      %148 = vector.extract_strided_slice %124 {offsets = [3, 0], sizes = [1, 128], strides = [1, 1]} : vector<30x128xf32> to vector<1x128xf32>
      %149 = vector.broadcast %147 : vector<1x128xf32> to vector<8x128xf32>
      %150 = arith.mulf %105, %149 : vector<8x128xf32>
      %151 = arith.mulf %150, %67 : vector<8x128xf32>
      %cst_33 = arith.constant 0.000000e+00 : f32
      %152 = vector.broadcast %cst_33 : f32 to vector<8x128xf32>
      %153 = arith.subf %152, %109 : vector<8x128xf32>
      %154 = vector.broadcast %148 : vector<1x128xf32> to vector<8x128xf32>
      %155 = arith.mulf %153, %154 : vector<8x128xf32>
      %156 = arith.mulf %155, %71 : vector<8x128xf32>
      %157 = arith.addf %151, %156 : vector<8x128xf32>
      %158 = vector.extract_strided_slice %124 {offsets = [3, 0], sizes = [1, 128], strides = [1, 1]} : vector<30x128xf32> to vector<1x128xf32>
      %159 = vector.extract_strided_slice %124 {offsets = [4, 0], sizes = [1, 128], strides = [1, 1]} : vector<30x128xf32> to vector<1x128xf32>
      %160 = vector.broadcast %158 : vector<1x128xf32> to vector<8x128xf32>
      %161 = arith.mulf %107, %160 : vector<8x128xf32>
      %162 = arith.mulf %161, %71 : vector<8x128xf32>
      %cst_34 = arith.constant 0.000000e+00 : f32
      %163 = vector.broadcast %cst_34 : f32 to vector<8x128xf32>
      %164 = arith.subf %163, %111 : vector<8x128xf32>
      %165 = vector.broadcast %159 : vector<1x128xf32> to vector<8x128xf32>
      %166 = arith.mulf %164, %165 : vector<8x128xf32>
      %167 = arith.mulf %166, %75 : vector<8x128xf32>
      %168 = arith.addf %162, %167 : vector<8x128xf32>
      %169 = vector.extract_strided_slice %124 {offsets = [4, 0], sizes = [1, 128], strides = [1, 1]} : vector<30x128xf32> to vector<1x128xf32>
      %170 = vector.extract_strided_slice %124 {offsets = [5, 0], sizes = [1, 128], strides = [1, 1]} : vector<30x128xf32> to vector<1x128xf32>
      %171 = vector.broadcast %169 : vector<1x128xf32> to vector<8x128xf32>
      %172 = arith.mulf %109, %171 : vector<8x128xf32>
      %173 = arith.mulf %172, %75 : vector<8x128xf32>
      %cst_35 = arith.constant 0.000000e+00 : f32
      %174 = vector.broadcast %cst_35 : f32 to vector<8x128xf32>
      %175 = arith.subf %174, %113 : vector<8x128xf32>
      %176 = vector.broadcast %170 : vector<1x128xf32> to vector<8x128xf32>
      %177 = arith.mulf %175, %176 : vector<8x128xf32>
      %178 = arith.mulf %177, %79 : vector<8x128xf32>
      %179 = arith.addf %173, %178 : vector<8x128xf32>
      %180 = vector.extract_strided_slice %124 {offsets = [5, 0], sizes = [1, 128], strides = [1, 1]} : vector<30x128xf32> to vector<1x128xf32>
      %181 = vector.extract_strided_slice %124 {offsets = [6, 0], sizes = [1, 128], strides = [1, 1]} : vector<30x128xf32> to vector<1x128xf32>
      %182 = vector.broadcast %180 : vector<1x128xf32> to vector<8x128xf32>
      %183 = arith.mulf %111, %182 : vector<8x128xf32>
      %184 = arith.mulf %183, %79 : vector<8x128xf32>
      %cst_36 = arith.constant 0.000000e+00 : f32
      %185 = vector.broadcast %cst_36 : f32 to vector<8x128xf32>
      %186 = arith.subf %185, %115 : vector<8x128xf32>
      %187 = vector.broadcast %181 : vector<1x128xf32> to vector<8x128xf32>
      %188 = arith.mulf %186, %187 : vector<8x128xf32>
      %189 = arith.mulf %188, %83 : vector<8x128xf32>
      %190 = arith.addf %184, %189 : vector<8x128xf32>
      %191 = vector.extract_strided_slice %124 {offsets = [6, 0], sizes = [1, 128], strides = [1, 1]} : vector<30x128xf32> to vector<1x128xf32>
      %192 = vector.extract_strided_slice %124 {offsets = [7, 0], sizes = [1, 128], strides = [1, 1]} : vector<30x128xf32> to vector<1x128xf32>
      %193 = vector.broadcast %191 : vector<1x128xf32> to vector<8x128xf32>
      %194 = arith.mulf %113, %193 : vector<8x128xf32>
      %195 = arith.mulf %194, %83 : vector<8x128xf32>
      %cst_37 = arith.constant 0.000000e+00 : f32
      %196 = vector.broadcast %cst_37 : f32 to vector<8x128xf32>
      %197 = arith.subf %196, %117 : vector<8x128xf32>
      %198 = vector.broadcast %192 : vector<1x128xf32> to vector<8x128xf32>
      %199 = arith.mulf %197, %198 : vector<8x128xf32>
      %200 = arith.mulf %199, %87 : vector<8x128xf32>
      %201 = arith.addf %195, %200 : vector<8x128xf32>
      %202 = vector.extract_strided_slice %124 {offsets = [7, 0], sizes = [1, 128], strides = [1, 1]} : vector<30x128xf32> to vector<1x128xf32>
      %203 = vector.extract_strided_slice %124 {offsets = [8, 0], sizes = [1, 128], strides = [1, 1]} : vector<30x128xf32> to vector<1x128xf32>
      %204 = vector.broadcast %202 : vector<1x128xf32> to vector<8x128xf32>
      %205 = arith.mulf %115, %204 : vector<8x128xf32>
      %206 = arith.mulf %205, %87 : vector<8x128xf32>
      %cst_38 = arith.constant 0.000000e+00 : f32
      %207 = vector.broadcast %cst_38 : f32 to vector<8x128xf32>
      %208 = arith.subf %207, %119 : vector<8x128xf32>
      %209 = vector.broadcast %203 : vector<1x128xf32> to vector<8x128xf32>
      %210 = arith.mulf %208, %209 : vector<8x128xf32>
      %211 = arith.mulf %210, %91 : vector<8x128xf32>
      %212 = arith.addf %206, %211 : vector<8x128xf32>
      %213 = vector.extract_strided_slice %124 {offsets = [8, 0], sizes = [1, 128], strides = [1, 1]} : vector<30x128xf32> to vector<1x128xf32>
      %214 = vector.extract_strided_slice %124 {offsets = [9, 0], sizes = [1, 128], strides = [1, 1]} : vector<30x128xf32> to vector<1x128xf32>
      %215 = vector.broadcast %213 : vector<1x128xf32> to vector<8x128xf32>
      %216 = arith.mulf %117, %215 : vector<8x128xf32>
      %217 = arith.mulf %216, %91 : vector<8x128xf32>
      %cst_39 = arith.constant 0.000000e+00 : f32
      %218 = vector.broadcast %cst_39 : f32 to vector<8x128xf32>
      %219 = arith.subf %218, %121 : vector<8x128xf32>
      %220 = vector.broadcast %214 : vector<1x128xf32> to vector<8x128xf32>
      %221 = arith.mulf %219, %220 : vector<8x128xf32>
      %222 = arith.mulf %221, %95 : vector<8x128xf32>
      %223 = arith.addf %217, %222 : vector<8x128xf32>
      %224 = vector.extract_strided_slice %124 {offsets = [9, 0], sizes = [1, 128], strides = [1, 1]} : vector<30x128xf32> to vector<1x128xf32>
      %225 = vector.extract_strided_slice %124 {offsets = [10, 0], sizes = [1, 128], strides = [1, 1]} : vector<30x128xf32> to vector<1x128xf32>
      %226 = vector.broadcast %224 : vector<1x128xf32> to vector<8x128xf32>
      %227 = arith.mulf %119, %226 : vector<8x128xf32>
      %228 = arith.mulf %227, %95 : vector<8x128xf32>
      %cst_40 = arith.constant 0.000000e+00 : f32
      %229 = vector.broadcast %cst_40 : f32 to vector<8x128xf32>
      %230 = arith.subf %229, %123 : vector<8x128xf32>
      %231 = vector.broadcast %225 : vector<1x128xf32> to vector<8x128xf32>
      %232 = arith.mulf %230, %231 : vector<8x128xf32>
      %233 = arith.mulf %232, %99 : vector<8x128xf32>
      %234 = arith.addf %228, %233 : vector<8x128xf32>
      %235 = vector.extract_strided_slice %124 {offsets = [11, 0], sizes = [1, 128], strides = [1, 1]} : vector<30x128xf32> to vector<1x128xf32>
      %236 = vector.extract_strided_slice %124 {offsets = [12, 0], sizes = [1, 128], strides = [1, 1]} : vector<30x128xf32> to vector<1x128xf32>
      %237 = vector.broadcast %235 : vector<1x128xf32> to vector<8x128xf32>
      %238 = arith.mulf %101, %237 : vector<8x128xf32>
      %239 = arith.mulf %238, %135 : vector<8x128xf32>
      %cst_41 = arith.constant 0.000000e+00 : f32
      %240 = vector.broadcast %cst_41 : f32 to vector<8x128xf32>
      %241 = arith.subf %240, %107 : vector<8x128xf32>
      %242 = vector.broadcast %236 : vector<1x128xf32> to vector<8x128xf32>
      %243 = arith.mulf %241, %242 : vector<8x128xf32>
      %244 = arith.mulf %243, %146 : vector<8x128xf32>
      %245 = arith.addf %239, %244 : vector<8x128xf32>
      %246 = vector.extract_strided_slice %124 {offsets = [12, 0], sizes = [1, 128], strides = [1, 1]} : vector<30x128xf32> to vector<1x128xf32>
      %247 = vector.extract_strided_slice %124 {offsets = [13, 0], sizes = [1, 128], strides = [1, 1]} : vector<30x128xf32> to vector<1x128xf32>
      %248 = vector.broadcast %246 : vector<1x128xf32> to vector<8x128xf32>
      %249 = arith.mulf %103, %248 : vector<8x128xf32>
      %250 = arith.mulf %249, %146 : vector<8x128xf32>
      %cst_42 = arith.constant 0.000000e+00 : f32
      %251 = vector.broadcast %cst_42 : f32 to vector<8x128xf32>
      %252 = arith.subf %251, %109 : vector<8x128xf32>
      %253 = vector.broadcast %247 : vector<1x128xf32> to vector<8x128xf32>
      %254 = arith.mulf %252, %253 : vector<8x128xf32>
      %255 = arith.mulf %254, %157 : vector<8x128xf32>
      %256 = arith.addf %250, %255 : vector<8x128xf32>
      %257 = vector.extract_strided_slice %124 {offsets = [13, 0], sizes = [1, 128], strides = [1, 1]} : vector<30x128xf32> to vector<1x128xf32>
      %258 = vector.extract_strided_slice %124 {offsets = [14, 0], sizes = [1, 128], strides = [1, 1]} : vector<30x128xf32> to vector<1x128xf32>
      %259 = vector.broadcast %257 : vector<1x128xf32> to vector<8x128xf32>
      %260 = arith.mulf %105, %259 : vector<8x128xf32>
      %261 = arith.mulf %260, %157 : vector<8x128xf32>
      %cst_43 = arith.constant 0.000000e+00 : f32
      %262 = vector.broadcast %cst_43 : f32 to vector<8x128xf32>
      %263 = arith.subf %262, %111 : vector<8x128xf32>
      %264 = vector.broadcast %258 : vector<1x128xf32> to vector<8x128xf32>
      %265 = arith.mulf %263, %264 : vector<8x128xf32>
      %266 = arith.mulf %265, %168 : vector<8x128xf32>
      %267 = arith.addf %261, %266 : vector<8x128xf32>
      %268 = vector.extract_strided_slice %124 {offsets = [14, 0], sizes = [1, 128], strides = [1, 1]} : vector<30x128xf32> to vector<1x128xf32>
      %269 = vector.extract_strided_slice %124 {offsets = [15, 0], sizes = [1, 128], strides = [1, 1]} : vector<30x128xf32> to vector<1x128xf32>
      %270 = vector.broadcast %268 : vector<1x128xf32> to vector<8x128xf32>
      %271 = arith.mulf %107, %270 : vector<8x128xf32>
      %272 = arith.mulf %271, %168 : vector<8x128xf32>
      %cst_44 = arith.constant 0.000000e+00 : f32
      %273 = vector.broadcast %cst_44 : f32 to vector<8x128xf32>
      %274 = arith.subf %273, %113 : vector<8x128xf32>
      %275 = vector.broadcast %269 : vector<1x128xf32> to vector<8x128xf32>
      %276 = arith.mulf %274, %275 : vector<8x128xf32>
      %277 = arith.mulf %276, %179 : vector<8x128xf32>
      %278 = arith.addf %272, %277 : vector<8x128xf32>
      %279 = vector.extract_strided_slice %124 {offsets = [15, 0], sizes = [1, 128], strides = [1, 1]} : vector<30x128xf32> to vector<1x128xf32>
      %280 = vector.extract_strided_slice %124 {offsets = [16, 0], sizes = [1, 128], strides = [1, 1]} : vector<30x128xf32> to vector<1x128xf32>
      %281 = vector.broadcast %279 : vector<1x128xf32> to vector<8x128xf32>
      %282 = arith.mulf %109, %281 : vector<8x128xf32>
      %283 = arith.mulf %282, %179 : vector<8x128xf32>
      %cst_45 = arith.constant 0.000000e+00 : f32
      %284 = vector.broadcast %cst_45 : f32 to vector<8x128xf32>
      %285 = arith.subf %284, %115 : vector<8x128xf32>
      %286 = vector.broadcast %280 : vector<1x128xf32> to vector<8x128xf32>
      %287 = arith.mulf %285, %286 : vector<8x128xf32>
      %288 = arith.mulf %287, %190 : vector<8x128xf32>
      %289 = arith.addf %283, %288 : vector<8x128xf32>
      %290 = vector.extract_strided_slice %124 {offsets = [16, 0], sizes = [1, 128], strides = [1, 1]} : vector<30x128xf32> to vector<1x128xf32>
      %291 = vector.extract_strided_slice %124 {offsets = [17, 0], sizes = [1, 128], strides = [1, 1]} : vector<30x128xf32> to vector<1x128xf32>
      %292 = vector.broadcast %290 : vector<1x128xf32> to vector<8x128xf32>
      %293 = arith.mulf %111, %292 : vector<8x128xf32>
      %294 = arith.mulf %293, %190 : vector<8x128xf32>
      %cst_46 = arith.constant 0.000000e+00 : f32
      %295 = vector.broadcast %cst_46 : f32 to vector<8x128xf32>
      %296 = arith.subf %295, %117 : vector<8x128xf32>
      %297 = vector.broadcast %291 : vector<1x128xf32> to vector<8x128xf32>
      %298 = arith.mulf %296, %297 : vector<8x128xf32>
      %299 = arith.mulf %298, %201 : vector<8x128xf32>
      %300 = arith.addf %294, %299 : vector<8x128xf32>
      %301 = vector.extract_strided_slice %124 {offsets = [17, 0], sizes = [1, 128], strides = [1, 1]} : vector<30x128xf32> to vector<1x128xf32>
      %302 = vector.extract_strided_slice %124 {offsets = [18, 0], sizes = [1, 128], strides = [1, 1]} : vector<30x128xf32> to vector<1x128xf32>
      %303 = vector.broadcast %301 : vector<1x128xf32> to vector<8x128xf32>
      %304 = arith.mulf %113, %303 : vector<8x128xf32>
      %305 = arith.mulf %304, %201 : vector<8x128xf32>
      %cst_47 = arith.constant 0.000000e+00 : f32
      %306 = vector.broadcast %cst_47 : f32 to vector<8x128xf32>
      %307 = arith.subf %306, %119 : vector<8x128xf32>
      %308 = vector.broadcast %302 : vector<1x128xf32> to vector<8x128xf32>
      %309 = arith.mulf %307, %308 : vector<8x128xf32>
      %310 = arith.mulf %309, %212 : vector<8x128xf32>
      %311 = arith.addf %305, %310 : vector<8x128xf32>
      %312 = vector.extract_strided_slice %124 {offsets = [18, 0], sizes = [1, 128], strides = [1, 1]} : vector<30x128xf32> to vector<1x128xf32>
      %313 = vector.extract_strided_slice %124 {offsets = [19, 0], sizes = [1, 128], strides = [1, 1]} : vector<30x128xf32> to vector<1x128xf32>
      %314 = vector.broadcast %312 : vector<1x128xf32> to vector<8x128xf32>
      %315 = arith.mulf %115, %314 : vector<8x128xf32>
      %316 = arith.mulf %315, %212 : vector<8x128xf32>
      %cst_48 = arith.constant 0.000000e+00 : f32
      %317 = vector.broadcast %cst_48 : f32 to vector<8x128xf32>
      %318 = arith.subf %317, %121 : vector<8x128xf32>
      %319 = vector.broadcast %313 : vector<1x128xf32> to vector<8x128xf32>
      %320 = arith.mulf %318, %319 : vector<8x128xf32>
      %321 = arith.mulf %320, %223 : vector<8x128xf32>
      %322 = arith.addf %316, %321 : vector<8x128xf32>
      %323 = vector.extract_strided_slice %124 {offsets = [19, 0], sizes = [1, 128], strides = [1, 1]} : vector<30x128xf32> to vector<1x128xf32>
      %324 = vector.extract_strided_slice %124 {offsets = [20, 0], sizes = [1, 128], strides = [1, 1]} : vector<30x128xf32> to vector<1x128xf32>
      %325 = vector.broadcast %323 : vector<1x128xf32> to vector<8x128xf32>
      %326 = arith.mulf %117, %325 : vector<8x128xf32>
      %327 = arith.mulf %326, %223 : vector<8x128xf32>
      %cst_49 = arith.constant 0.000000e+00 : f32
      %328 = vector.broadcast %cst_49 : f32 to vector<8x128xf32>
      %329 = arith.subf %328, %123 : vector<8x128xf32>
      %330 = vector.broadcast %324 : vector<1x128xf32> to vector<8x128xf32>
      %331 = arith.mulf %329, %330 : vector<8x128xf32>
      %332 = arith.mulf %331, %234 : vector<8x128xf32>
      %333 = arith.addf %327, %332 : vector<8x128xf32>
      %334 = vector.extract_strided_slice %124 {offsets = [21, 0], sizes = [1, 128], strides = [1, 1]} : vector<30x128xf32> to vector<1x128xf32>
      %335 = vector.extract_strided_slice %124 {offsets = [22, 0], sizes = [1, 128], strides = [1, 1]} : vector<30x128xf32> to vector<1x128xf32>
      %336 = vector.broadcast %334 : vector<1x128xf32> to vector<8x128xf32>
      %337 = arith.mulf %101, %336 : vector<8x128xf32>
      %338 = arith.mulf %337, %245 : vector<8x128xf32>
      %cst_50 = arith.constant 0.000000e+00 : f32
      %339 = vector.broadcast %cst_50 : f32 to vector<8x128xf32>
      %340 = arith.subf %339, %109 : vector<8x128xf32>
      %341 = vector.broadcast %335 : vector<1x128xf32> to vector<8x128xf32>
      %342 = arith.mulf %340, %341 : vector<8x128xf32>
      %343 = arith.mulf %342, %256 : vector<8x128xf32>
      %344 = arith.addf %338, %343 : vector<8x128xf32>
      %c0_51 = arith.constant 0 : index
      %c0_52 = arith.constant 0 : index
      %345 = vector.load %arg9[%c0_51, %c0_52] : memref<8x1024xf32, #tpu.memory_space<vmem>>, vector<8x128xf32>
      tpu.vector_store %arg9[%c0_51, %c0_52], %344 {strides = array<i32>} : memref<8x1024xf32, #tpu.memory_space<vmem>>, vector<8x128xf32>,
      %346 = vector.extract_strided_slice %124 {offsets = [22, 0], sizes = [1, 128], strides = [1, 1]} : vector<30x128xf32> to vector<1x128xf32>
      %347 = vector.extract_strided_slice %124 {offsets = [23, 0], sizes = [1, 128], strides = [1, 1]} : vector<30x128xf32> to vector<1x128xf32>
      %348 = vector.broadcast %346 : vector<1x128xf32> to vector<8x128xf32>
      %349 = arith.mulf %103, %348 : vector<8x128xf32>
      %350 = arith.mulf %349, %256 : vector<8x128xf32>
      %cst_53 = arith.constant 0.000000e+00 : f32
      %351 = vector.broadcast %cst_53 : f32 to vector<8x128xf32>
      %352 = arith.subf %351, %111 : vector<8x128xf32>
      %353 = vector.broadcast %347 : vector<1x128xf32> to vector<8x128xf32>
      %354 = arith.mulf %352, %353 : vector<8x128xf32>
      %355 = arith.mulf %354, %267 : vector<8x128xf32>
      %356 = arith.addf %350, %355 : vector<8x128xf32>
      %c0_54 = arith.constant 0 : index
      %c128 = arith.constant 128 : index
      %357 = vector.load %arg9[%c0_54, %c128] : memref<8x1024xf32, #tpu.memory_space<vmem>>, vector<8x128xf32>
      tpu.vector_store %arg9[%c0_54, %c128], %356 {strides = array<i32>} : memref<8x1024xf32, #tpu.memory_space<vmem>>, vector<8x128xf32>,
      %358 = vector.extract_strided_slice %124 {offsets = [23, 0], sizes = [1, 128], strides = [1, 1]} : vector<30x128xf32> to vector<1x128xf32>
      %359 = vector.extract_strided_slice %124 {offsets = [24, 0], sizes = [1, 128], strides = [1, 1]} : vector<30x128xf32> to vector<1x128xf32>
      %360 = vector.broadcast %358 : vector<1x128xf32> to vector<8x128xf32>
      %361 = arith.mulf %105, %360 : vector<8x128xf32>
      %362 = arith.mulf %361, %267 : vector<8x128xf32>
      %cst_55 = arith.constant 0.000000e+00 : f32
      %363 = vector.broadcast %cst_55 : f32 to vector<8x128xf32>
      %364 = arith.subf %363, %113 : vector<8x128xf32>
      %365 = vector.broadcast %359 : vector<1x128xf32> to vector<8x128xf32>
      %366 = arith.mulf %364, %365 : vector<8x128xf32>
      %367 = arith.mulf %366, %278 : vector<8x128xf32>
      %368 = arith.addf %362, %367 : vector<8x128xf32>
      %c0_56 = arith.constant 0 : index
      %c256 = arith.constant 256 : index
      %369 = vector.load %arg9[%c0_56, %c256] : memref<8x1024xf32, #tpu.memory_space<vmem>>, vector<8x128xf32>
      tpu.vector_store %arg9[%c0_56, %c256], %368 {strides = array<i32>} : memref<8x1024xf32, #tpu.memory_space<vmem>>, vector<8x128xf32>,
      %370 = vector.extract_strided_slice %124 {offsets = [24, 0], sizes = [1, 128], strides = [1, 1]} : vector<30x128xf32> to vector<1x128xf32>
      %371 = vector.extract_strided_slice %124 {offsets = [25, 0], sizes = [1, 128], strides = [1, 1]} : vector<30x128xf32> to vector<1x128xf32>
      %372 = vector.broadcast %370 : vector<1x128xf32> to vector<8x128xf32>
      %373 = arith.mulf %107, %372 : vector<8x128xf32>
      %374 = arith.mulf %373, %278 : vector<8x128xf32>
      %cst_57 = arith.constant 0.000000e+00 : f32
      %375 = vector.broadcast %cst_57 : f32 to vector<8x128xf32>
      %376 = arith.subf %375, %115 : vector<8x128xf32>
      %377 = vector.broadcast %371 : vector<1x128xf32> to vector<8x128xf32>
      %378 = arith.mulf %376, %377 : vector<8x128xf32>
      %379 = arith.mulf %378, %289 : vector<8x128xf32>
      %380 = arith.addf %374, %379 : vector<8x128xf32>
      %c0_58 = arith.constant 0 : index
      %c384 = arith.constant 384 : index
      %381 = vector.load %arg9[%c0_58, %c384] : memref<8x1024xf32, #tpu.memory_space<vmem>>, vector<8x128xf32>
      tpu.vector_store %arg9[%c0_58, %c384], %380 {strides = array<i32>} : memref<8x1024xf32, #tpu.memory_space<vmem>>, vector<8x128xf32>,
      %382 = vector.extract_strided_slice %124 {offsets = [25, 0], sizes = [1, 128], strides = [1, 1]} : vector<30x128xf32> to vector<1x128xf32>
      %383 = vector.extract_strided_slice %124 {offsets = [26, 0], sizes = [1, 128], strides = [1, 1]} : vector<30x128xf32> to vector<1x128xf32>
      %384 = vector.broadcast %382 : vector<1x128xf32> to vector<8x128xf32>
      %385 = arith.mulf %109, %384 : vector<8x128xf32>
      %386 = arith.mulf %385, %289 : vector<8x128xf32>
      %cst_59 = arith.constant 0.000000e+00 : f32
      %387 = vector.broadcast %cst_59 : f32 to vector<8x128xf32>
      %388 = arith.subf %387, %117 : vector<8x128xf32>
      %389 = vector.broadcast %383 : vector<1x128xf32> to vector<8x128xf32>
      %390 = arith.mulf %388, %389 : vector<8x128xf32>
      %391 = arith.mulf %390, %300 : vector<8x128xf32>
      %392 = arith.addf %386, %391 : vector<8x128xf32>
      %c0_60 = arith.constant 0 : index
      %c512 = arith.constant 512 : index
      %393 = vector.load %arg9[%c0_60, %c512] : memref<8x1024xf32, #tpu.memory_space<vmem>>, vector<8x128xf32>
      tpu.vector_store %arg9[%c0_60, %c512], %392 {strides = array<i32>} : memref<8x1024xf32, #tpu.memory_space<vmem>>, vector<8x128xf32>,
      %394 = vector.extract_strided_slice %124 {offsets = [26, 0], sizes = [1, 128], strides = [1, 1]} : vector<30x128xf32> to vector<1x128xf32>
      %395 = vector.extract_strided_slice %124 {offsets = [27, 0], sizes = [1, 128], strides = [1, 1]} : vector<30x128xf32> to vector<1x128xf32>
      %396 = vector.broadcast %394 : vector<1x128xf32> to vector<8x128xf32>
      %397 = arith.mulf %111, %396 : vector<8x128xf32>
      %398 = arith.mulf %397, %300 : vector<8x128xf32>
      %cst_61 = arith.constant 0.000000e+00 : f32
      %399 = vector.broadcast %cst_61 : f32 to vector<8x128xf32>
      %400 = arith.subf %399, %119 : vector<8x128xf32>
      %401 = vector.broadcast %395 : vector<1x128xf32> to vector<8x128xf32>
      %402 = arith.mulf %400, %401 : vector<8x128xf32>
      %403 = arith.mulf %402, %311 : vector<8x128xf32>
      %404 = arith.addf %398, %403 : vector<8x128xf32>
      %c0_62 = arith.constant 0 : index
      %c640 = arith.constant 640 : index
      %405 = vector.load %arg9[%c0_62, %c640] : memref<8x1024xf32, #tpu.memory_space<vmem>>, vector<8x128xf32>
      tpu.vector_store %arg9[%c0_62, %c640], %404 {strides = array<i32>} : memref<8x1024xf32, #tpu.memory_space<vmem>>, vector<8x128xf32>,
      %406 = vector.extract_strided_slice %124 {offsets = [27, 0], sizes = [1, 128], strides = [1, 1]} : vector<30x128xf32> to vector<1x128xf32>
      %407 = vector.extract_strided_slice %124 {offsets = [28, 0], sizes = [1, 128], strides = [1, 1]} : vector<30x128xf32> to vector<1x128xf32>
      %408 = vector.broadcast %406 : vector<1x128xf32> to vector<8x128xf32>
      %409 = arith.mulf %113, %408 : vector<8x128xf32>
      %410 = arith.mulf %409, %311 : vector<8x128xf32>
      %cst_63 = arith.constant 0.000000e+00 : f32
      %411 = vector.broadcast %cst_63 : f32 to vector<8x128xf32>
      %412 = arith.subf %411, %121 : vector<8x128xf32>
      %413 = vector.broadcast %407 : vector<1x128xf32> to vector<8x128xf32>
      %414 = arith.mulf %412, %413 : vector<8x128xf32>
      %415 = arith.mulf %414, %322 : vector<8x128xf32>
      %416 = arith.addf %410, %415 : vector<8x128xf32>
      %c0_64 = arith.constant 0 : index
      %c768 = arith.constant 768 : index
      %417 = vector.load %arg9[%c0_64, %c768] : memref<8x1024xf32, #tpu.memory_space<vmem>>, vector<8x128xf32>
      tpu.vector_store %arg9[%c0_64, %c768], %416 {strides = array<i32>} : memref<8x1024xf32, #tpu.memory_space<vmem>>, vector<8x128xf32>,
      %418 = vector.extract_strided_slice %124 {offsets = [28, 0], sizes = [1, 128], strides = [1, 1]} : vector<30x128xf32> to vector<1x128xf32>
      %419 = vector.extract_strided_slice %124 {offsets = [29, 0], sizes = [1, 128], strides = [1, 1]} : vector<30x128xf32> to vector<1x128xf32>
      %420 = vector.broadcast %418 : vector<1x128xf32> to vector<8x128xf32>
      %421 = arith.mulf %115, %420 : vector<8x128xf32>
      %422 = arith.mulf %421, %322 : vector<8x128xf32>
      %cst_65 = arith.constant 0.000000e+00 : f32
      %423 = vector.broadcast %cst_65 : f32 to vector<8x128xf32>
      %424 = arith.subf %423, %123 : vector<8x128xf32>
      %425 = vector.broadcast %419 : vector<1x128xf32> to vector<8x128xf32>
      %426 = arith.mulf %424, %425 : vector<8x128xf32>
      %427 = arith.mulf %426, %333 : vector<8x128xf32>
      %428 = arith.addf %422, %427 : vector<8x128xf32>
      %c0_66 = arith.constant 0 : index
      %c896 = arith.constant 896 : index
      %429 = vector.load %arg9[%c0_66, %c896] : memref<8x1024xf32, #tpu.memory_space<vmem>>, vector<8x128xf32>
      tpu.vector_store %arg9[%c0_66, %c896], %428 {strides = array<i32>} : memref<8x1024xf32, #tpu.memory_space<vmem>>, vector<8x128xf32>,
    } else {
    }
    %c0 = arith.constant 0 : index
    %c0_1 = arith.constant 0 : index
    %3 = vector.load %arg8[%c0, %c0_1] : memref<8x128xf32, #tpu.memory_space<vmem>>, vector<8x128xf32>
    %c0_2 = arith.constant 0 : index
    %c0_3 = arith.constant 0 : index
    %4 = vector.load %arg5[%c0_2, %c0_3] : memref<128x128xf32, #tpu.memory_space<vmem>>, vector<128x128xf32>
    %cst = arith.constant dense<0.000000e+00> : vector<8x128xf32>
    %5 = tpu.matmul %3, %4, %cst {dimension_numbers = #tpu.dot_dimension_numbers<[1], [1], [0], [0], [0, 0, 1, 0], [], []>} : vector<8x128xf32>, vector<128x128xf32>, vector<8x128xf32> -> vector<8x128xf32>
    %c0_4 = arith.constant 0 : index
    %c0_5 = arith.constant 0 : index
    %6 = vector.load %arg9[%c0_4, %c0_5] : memref<8x1024xf32, #tpu.memory_space<vmem>>, vector<8x1024xf32>
    %c0_6 = arith.constant 0 : index
    %c0_7 = arith.constant 0 : index
    %7 = vector.load %arg6[%c0_6, %c0_7] : memref<128x1024xf32, #tpu.memory_space<vmem>>, vector<128x1024xf32>
    %cst_8 = arith.constant dense<0.000000e+00> : vector<8x128xf32>
    %8 = tpu.matmul %6, %7, %cst_8 {dimension_numbers = #tpu.dot_dimension_numbers<[1], [1], [0], [0], [0, 0, 1, 0], [], []>} : vector<8x1024xf32>, vector<128x1024xf32>, vector<8x128xf32> -> vector<8x128xf32>
    %9 = arith.addf %5, %8 : vector<8x128xf32>
    %c0_9 = arith.constant 0 : index
    %c0_10 = arith.constant 0 : index
    %10 = vector.load %arg7[%c0_9, %c0_10] : memref<8x128xf32, #tpu.memory_space<vmem>>, vector<8x128xf32>
    tpu.vector_store %arg7[%c0_9, %c0_10], %9 {strides = array<i32>} : memref<8x128xf32, #tpu.memory_space<vmem>>, vector<8x128xf32>,
    return
  }
  func.func @transform_0(%arg0: i32, %arg1: i32) -> (i32, i32) {
    %c0_i32 = arith.constant 0 : i32
    %c0_i32_0 = arith.constant 0 : i32
    return %arg0, %c0_i32 : i32, i32
  }
  func.func @transform_1(%arg0: i32, %arg1: i32) -> (i32, i32) {
    %c0_i32 = arith.constant 0 : i32
    %c0_i32_0 = arith.constant 0 : i32
    %c0_i32_1 = arith.constant 0 : i32
    return %c0_i32, %c0_i32_0 : i32, i32
  }
  func.func @transform_2(%arg0: i32, %arg1: i32) -> (i32, i32) {
    %c0_i32 = arith.constant 0 : i32
    %c0_i32_0 = arith.constant 0 : i32
    %c0_i32_1 = arith.constant 0 : i32
    return %c0_i32, %c0_i32_0 : i32, i32
  }
  func.func @transform_3(%arg0: i32, %arg1: i32) -> (i32, i32) {
    %c0_i32 = arith.constant 0 : i32
    %c0_i32_0 = arith.constant 0 : i32
    return %arg1, %c0_i32 : i32, i32
  }
  func.func @transform_4(%arg0: i32, %arg1: i32) -> (i32, i32) {
    %c0_i32 = arith.constant 0 : i32
    %c0_i32_0 = arith.constant 0 : i32
    return %arg1, %c0_i32 : i32, i32
  }
  func.func @transform_5(%arg0: i32, %arg1: i32) -> (i32, i32) {
    %c0_i32 = arith.constant 0 : i32
    return %arg0, %arg1 : i32, i32
  }
}

</mosaic_0001>

<llo_original>
// kernel: tpu_custom_call.1
$region0: #{tpu_custom_call.1}
  #allocation0 [shape = 'u32[]', space=smem, size = 0x4, offset = 0x4, fixed_abs, tag = 'smem constant byte address 0x4 - core index']
  #allocation1 [shape = 'u32[72,128]{1,0:T(1,128)}', space=vmem, size = 0x9000, scoped, tag = 'internal scratch']
  #allocation2 [shape = 'f32[8,128]{1,0:T(8,128)}', space=vmem, size = 0x1000, scoped, tag = 'scratch operand']
  #allocation3 [shape = 'f32[8,1024]{1,0:T(8,128)}', space=vmem, size = 0x8000, scoped, tag = 'scratch operand']
  %s0 = inlined_call_operand.hbm [shape: f32[8,128], index: 0, kind: input, shape index: {}]
  %s1 = inlined_call_operand.hbm [shape: f32[12,128], index: 1, kind: input, shape index: {}]
  %s2 = inlined_call_operand.hbm [shape: f32[30,128], index: 2, kind: input, shape index: {}]
  %s3 = inlined_call_operand.hbm [shape: f32[128,128], index: 3, kind: input, shape index: {}]
  %s4 = inlined_call_operand.hbm [shape: f32[128,1024], index: 4, kind: input, shape index: {}]
  %s5 = inlined_call_operand.hbm [shape: f32[8,128], index: 5, kind: output, shape index: {}]
  %s6 = sld [smem:[#allocation0]]
  $region54: #{tpu_custom_call.1} parent=0
    _
  %s8 = ssub.s32 1, %s6
  %s9 = scalar_select 0, %s8, %s6
  $region1: #{tpu_custom_call.1} parent=0
    #allocation4 [shape = 'u8[4096]{0}', space=vmem, size = 0x1000, scoped, tag = 'input window, operand 0, single buffered']
    #allocation5 [shape = 's32[1]{0}', space=sflag, size = 0x4, scoped, tag = 'scoped memory for tpu_custom_call.1']
    #allocation6 [shape = 's32[1]{0}', space=sflag, size = 0x4, scoped, tag = 'scoped memory for tpu_custom_call.1']
    #allocation7 [shape = 'u8[8192]{0}', space=vmem, size = 0x2000, scoped, tag = 'input window, operand 1, single buffered']
    #allocation8 [shape = 's32[1]{0}', space=sflag, size = 0x4, scoped, tag = 'scoped memory for tpu_custom_call.1']
    #allocation9 [shape = 'u8[16384]{0}', space=vmem, size = 0x4000, scoped, tag = 'input window, operand 2, single buffered']
    #allocation10 [shape = 'u8[65536]{0}', space=vmem, size = 0x10000, scoped, tag = 'input window, operand 3, single buffered']
    #allocation11 [shape = 's32[1]{0}', space=sflag, size = 0x4, scoped, tag = 'scoped memory for tpu_custom_call.1']
    #allocation12 [shape = 'u8[524288]{0}', space=vmem, size = 0x80000, scoped, tag = 'input window, operand 4, single buffered']
    #allocation13 [shape = 'u8[4096]{0}', space=vmem, size = 0x1000, scoped, tag = 'output window, operand 0, single buffered']
    %10 = vsyncpa [#allocation5], 0
    %11 = vsyncpa [#allocation8], 0
    %12 = vsyncpa [#allocation11], 0
    %13 = vsyncpa [#allocation6], 0
    // Predicated region
    $region2: #{tpu_custom_call.1} parent=1 // pred_check
      _
    $region3: #{tpu_custom_call.1} parent=1 // pred_check_branch
      %15 = sbr.rel (0) target = $region5
    $region4: #{tpu_custom_call.1} parent=1 // pred_region
      %17 = vsyncadd [#allocation5], 0
      %s19 = sshll.u32 %s0, 4
      %s20 = int_to_ptr.hbm [resolvable:$true] %s19
      %s21 = sshll.u32 [#allocation4], 4
      %s22 = int_to_ptr.vmem [resolvable:$true] %s21
      %24 = dma.hbm_to_vmem [thread:$0]  %s20, 128, %s22, [#allocation5]
    $region5: #{tpu_custom_call.1} parent=1 // pred_fallthru
      _
    // Predicated region
    $region6: #{tpu_custom_call.1} parent=1 // pred_check
      _
    $region7: #{tpu_custom_call.1} parent=1 // pred_check_branch
      %26 = sbr.rel (0) target = $region9
    $region8: #{tpu_custom_call.1} parent=1 // pred_region
      %28 = vsyncadd [#allocation8], 0
      %s29 = sshll.u32 %s1, 4
      %s30 = int_to_ptr.hbm [resolvable:$true] %s29
      %s31 = sshll.u32 [#allocation7], 4
      %s32 = int_to_ptr.vmem [resolvable:$true] %s31
      %37 = dma.hbm_to_vmem [thread:$0]  %s30, 256, %s32, [#allocation8], 128, 128, 8
    $region9: #{tpu_custom_call.1} parent=1 // pred_fallthru
      _
    // Predicated region
    $region10: #{tpu_custom_call.1} parent=1 // pred_check
      _
    $region11: #{tpu_custom_call.1} parent=1 // pred_check_branch
      %39 = sbr.rel (0) target = $region13
    $region12: #{tpu_custom_call.1} parent=1 // pred_region
      %41 = vsyncadd [#allocation8], 0
      %s42 = sshll.u32 %s2, 4
      %s43 = int_to_ptr.hbm [resolvable:$true] %s42
      %s44 = sshll.u32 [#allocation9], 4
      %s45 = int_to_ptr.vmem [resolvable:$true] %s44
      %50 = dma.hbm_to_vmem [thread:$0]  %s43, 512, %s45, [#allocation8], 128, 128, 8
    $region13: #{tpu_custom_call.1} parent=1 // pred_fallthru
      _
    // Predicated region
    $region14: #{tpu_custom_call.1} parent=1 // pred_check
      _
    $region15: #{tpu_custom_call.1} parent=1 // pred_check_branch
      %52 = sbr.rel (0) target = $region17
    $region16: #{tpu_custom_call.1} parent=1 // pred_region
      %54 = vsyncadd [#allocation11], 0
      %s55 = sshll.u32 %s3, 4
      %s56 = int_to_ptr.hbm [resolvable:$true] %s55
      %s57 = sshll.u32 [#allocation10], 4
      %s58 = int_to_ptr.vmem [resolvable:$true] %s57
      %63 = dma.hbm_to_vmem [thread:$0]  %s56, 2048, %s58, [#allocation11], 128, 128, 8
    $region17: #{tpu_custom_call.1} parent=1 // pred_fallthru
      _
    // Predicated region
    $region18: #{tpu_custom_call.1} parent=1 // pred_check
      _
    $region19: #{tpu_custom_call.1} parent=1 // pred_check_branch
      %65 = sbr.rel (0) target = $region21
    $region20: #{tpu_custom_call.1} parent=1 // pred_region
      %67 = vsyncadd [#allocation11], 0
      %s68 = sshll.u32 %s4, 4
      %s69 = int_to_ptr.hbm [resolvable:$true] %s68
      %s70 = sshll.u32 [#allocation12], 4
      %s71 = int_to_ptr.vmem [resolvable:$true] %s70
      %76 = dma.hbm_to_vmem [thread:$0]  %s69, 16384, %s71, [#allocation11], 1024, 1024, 64
    $region21: #{tpu_custom_call.1} parent=1 // pred_fallthru
      _
    // Predicated region
    $region22: #{tpu_custom_call.1} parent=1 // pred_check
      _
    $region23: #{tpu_custom_call.1} parent=1 // pred_check_branch
      %78 = sbr.rel (0) target = $region25
    $region24: #{tpu_custom_call.1} parent=1 // pred_region
      %80 = dma.done [#allocation5], 128
    $region25: #{tpu_custom_call.1} parent=1 // pred_fallthru
      _
    // Predicated region
    $region26: #{tpu_custom_call.1} parent=1 // pred_check
      _
    $region27: #{tpu_custom_call.1} parent=1 // pred_check_branch
      %82 = sbr.rel (0) target = $region29
    $region28: #{tpu_custom_call.1} parent=1 // pred_region
      %84 = dma.done [#allocation8], 256
    $region29: #{tpu_custom_call.1} parent=1 // pred_fallthru
      _
    // Predicated region
    $region30: #{tpu_custom_call.1} parent=1 // pred_check
      _
    $region31: #{tpu_custom_call.1} parent=1 // pred_check_branch
      %86 = sbr.rel (0) target = $region33
    $region32: #{tpu_custom_call.1} parent=1 // pred_region
      %88 = dma.done [#allocation8], 512
    $region33: #{tpu_custom_call.1} parent=1 // pred_fallthru
      _
    // Predicated region
    $region34: #{tpu_custom_call.1} parent=1 // pred_check
      _
    $region35: #{tpu_custom_call.1} parent=1 // pred_check_branch
      %90 = sbr.rel (0) target = $region37
    $region36: #{tpu_custom_call.1} parent=1 // pred_region
      %92 = dma.done [#allocation11], 2048
    $region37: #{tpu_custom_call.1} parent=1 // pred_fallthru
      _
    // Predicated region
    $region38: #{tpu_custom_call.1} parent=1 // pred_check
      _
    $region39: #{tpu_custom_call.1} parent=1 // pred_check_branch
      %94 = sbr.rel (0) target = $region41
    $region40: #{tpu_custom_call.1} parent=1 // pred_region
      %96 = dma.done [#allocation11], 16384
    $region41: #{tpu_custom_call.1} parent=1 // pred_fallthru
      _
    %p97 = scmp.eq.s32.totalorder 0, 0
    // Predicated region
    $region42: #{tpu_custom_call.1} parent=1 // pred_check
      %p98 = pneg %p97
    $region43: #{tpu_custom_call.1} parent=1 // pred_check_branch
      %100 = sbr.rel (%p98) target = $region45
    $region44: #{tpu_custom_call.1} parent=1 // pred_region
      %v101 = vld [vmem:[#allocation4] sm:$0xff]
      %v102 = vld [vmem:[#allocation7] sm:$0xff]
      %v103 = vld [vmem:[#allocation7 + $0x8] sm:$0xf]
      %v104 = vxor.u32 %v101, 2147483648
      %v105 = vmul.f32 %v104, 1.442695
      %v106 = vpow.pop %v105
      %v107 = vadd.f32 %v106, 1.0
      %v108 = vrcp.pop %v107
      %v109 = vmul.f32 %v107, %v108
      %v110 = vsub.f32 1.0, %v109
      %v111 = vmul.f32 %v108, %v110
      %v112 = vadd.f32 %v108, %v111
      %vm113 = vweird.f32 %v107
      %vm114 = vweird.f32 %v108
      %vm115 = vmor %vm113, %vm114
      %v116 = vsel %vm115, %v108, %v112
      %v117 = vand.u32 2147483647, %v107
      %vm118 = vcmp.eq.f32.partialorder %v117, 8.507059e+37
      %v119 = vand.u32 %v107, 2147483648
      %v120 = vor.u32 1.1754944e-38, %v119
      %v121 = vsel %vm118, %v120, %v116
      %v122 = vmul.f32 1.0, %v121
      %v123 = vmul.f32 %v101, %v122
      %124 = vst [vmem:[#allocation2] sm:$0xff] %v123
      %v125 = vperm.slane %v102, 0
      %vm126 = vcmp.ge.f32.partialorder %v101, %v125
      %v127 = vperm.slane %v102, 1
      %vm128 = vcmp.ge.f32.partialorder %v101, %v127
      %v129 = vperm.slane %v102, 2
      %vm130 = vcmp.ge.f32.partialorder %v101, %v129
      %v131 = vperm.slane %v102, 3
      %vm132 = vcmp.ge.f32.partialorder %v101, %v131
      %v133 = vperm.slane %v102, 4
      %vm134 = vcmp.ge.f32.partialorder %v101, %v133
      %v135 = vperm.slane %v102, 5
      %vm136 = vcmp.ge.f32.partialorder %v101, %v135
      %v137 = vperm.slane %v102, 6
      %vm138 = vcmp.ge.f32.partialorder %v101, %v137
      %v139 = vperm.slane %v102, 7
      %vm140 = vcmp.ge.f32.partialorder %v101, %v139
      %v141 = vperm.slane %v103, 0
      %vm142 = vcmp.ge.f32.partialorder %v101, %v141
      %v143 = vperm.slane %v103, 1
      %vm144 = vcmp.ge.f32.partialorder %v101, %v143
      %v145 = vperm.slane %v103, 2
      %vm146 = vcmp.ge.f32.partialorder %v101, %v145
      %v147 = vperm.slane %v103, 3
      %vm148 = vcmp.ge.f32.partialorder %v101, %v147
      %vm149 = vmxor %vm128, 1
      %vm150 = vmand %vm126, %vm149
      %v151 = vsel %vm150, 1, 0
      %v152 = vcvt.s32.f32 %v151
      %vm153 = vmxor %vm130, 1
      %vm154 = vmand %vm128, %vm153
      %v155 = vsel %vm154, 1, 0
      %v156 = vcvt.s32.f32 %v155
      %vm157 = vmxor %vm132, 1
      %vm158 = vmand %vm130, %vm157
      %v159 = vsel %vm158, 1, 0
      %v160 = vcvt.s32.f32 %v159
      %vm161 = vmxor %vm134, 1
      %vm162 = vmand %vm132, %vm161
      %v163 = vsel %vm162, 1, 0
      %v164 = vcvt.s32.f32 %v163
      %vm165 = vmxor %vm136, 1
      %vm166 = vmand %vm134, %vm165
      %v167 = vsel %vm166, 1, 0
      %v168 = vcvt.s32.f32 %v167
      %vm169 = vmxor %vm138, 1
      %vm170 = vmand %vm136, %vm169
      %v171 = vsel %vm170, 1, 0
      %v172 = vcvt.s32.f32 %v171
      %vm173 = vmxor %vm140, 1
      %vm174 = vmand %vm138, %vm173
      %v175 = vsel %vm174, 1, 0
      %v176 = vcvt.s32.f32 %v175
      %vm177 = vmxor %vm142, 1
      %vm178 = vmand %vm140, %vm177
      %v179 = vsel %vm178, 1, 0
      %v180 = vcvt.s32.f32 %v179
      %vm181 = vmxor %vm144, 1
      %vm182 = vmand %vm142, %vm181
      %v183 = vsel %vm182, 1, 0
      %v184 = vcvt.s32.f32 %v183
      %vm185 = vmxor %vm146, 1
      %vm186 = vmand %vm144, %vm185
      %v187 = vsel %vm186, 1, 0
      %v188 = vcvt.s32.f32 %v187
      %vm189 = vmxor %vm148, 1
      %vm190 = vmand %vm146, %vm189
      %v191 = vsel %vm190, 1, 0
      %v192 = vcvt.s32.f32 %v191
      %v193 = vsub.f32 %v101, %v125
      %v194 = vsub.f32 %v101, %v127
      %v195 = vsub.f32 %v101, %v129
      %v196 = vsub.f32 %v101, %v131
      %v197 = vsub.f32 %v101, %v133
      %v198 = vsub.f32 %v101, %v135
      %v199 = vsub.f32 %v101, %v137
      %v200 = vsub.f32 %v101, %v139
      %v201 = vsub.f32 %v101, %v141
      %v202 = vsub.f32 %v101, %v143
      %v203 = vsub.f32 %v101, %v145
      %v204 = vsub.f32 %v101, %v147
      %v205 = vld [vmem:[#allocation9] sm:$0xff]
      %v206 = vld [vmem:[#allocation9 + $0x8] sm:$0xff]
      %v207 = vld [vmem:[#allocation9 + $0x10] sm:$0xff]
      %v208 = vld [vmem:[#allocation9 + $0x18] sm:$0x3f]
      %v209 = vperm.slane %v205, 0
      %v210 = vmul.f32 %v193, %v209
      %v211 = vmul.f32 %v210, %v152
      %v212 = vsub.f32 0.0, %v195
      %v213 = vperm.slane %v205, 1
      %v214 = vmul.f32 %v212, %v213
      %v215 = vmul.f32 %v214, %v156
      %v216 = vadd.f32 %v211, %v215
      %v217 = vmul.f32 %v194, %v213
      %v218 = vmul.f32 %v217, %v156
      %v219 = vsub.f32 0.0, %v196
      %v220 = vperm.slane %v205, 2
      %v221 = vmul.f32 %v219, %v220
      %v222 = vmul.f32 %v221, %v160
      %v223 = vadd.f32 %v218, %v222
      %v224 = vmul.f32 %v195, %v220
      %v225 = vmul.f32 %v224, %v160
      %v226 = vsub.f32 0.0, %v197
      %v227 = vperm.slane %v205, 3
      %v228 = vmul.f32 %v226, %v227
      %v229 = vmul.f32 %v228, %v164
      %v230 = vadd.f32 %v225, %v229
      %v231 = vmul.f32 %v196, %v227
      %v232 = vmul.f32 %v231, %v164
      %v233 = vsub.f32 0.0, %v198
      %v234 = vperm.slane %v205, 4
      %v235 = vmul.f32 %v233, %v234
      %v236 = vmul.f32 %v235, %v168
      %v237 = vadd.f32 %v232, %v236
      %v238 = vmul.f32 %v197, %v234
      %v239 = vmul.f32 %v238, %v168
      %v240 = vsub.f32 0.0, %v199
      %v241 = vperm.slane %v205, 5
      %v242 = vmul.f32 %v240, %v241
      %v243 = vmul.f32 %v242, %v172
      %v244 = vadd.f32 %v239, %v243
      %v245 = vmul.f32 %v198, %v241
      %v246 = vmul.f32 %v245, %v172
      %v247 = vsub.f32 0.0, %v200
      %v248 = vperm.slane %v205, 6
      %v249 = vmul.f32 %v247, %v248
      %v250 = vmul.f32 %v249, %v176
      %v251 = vadd.f32 %v246, %v250
      %v252 = vmul.f32 %v199, %v248
      %v253 = vmul.f32 %v252, %v176
      %v254 = vsub.f32 0.0, %v201
      %v255 = vperm.slane %v205, 7
      %v256 = vmul.f32 %v254, %v255
      %v257 = vmul.f32 %v256, %v180
      %v258 = vadd.f32 %v253, %v257
      %v259 = vmul.f32 %v200, %v255
      %v260 = vmul.f32 %v259, %v180
      %v261 = vsub.f32 0.0, %v202
      %v262 = vperm.slane %v206, 0
      %v263 = vmul.f32 %v261, %v262
      %v264 = vmul.f32 %v263, %v184
      %v265 = vadd.f32 %v260, %v264
      %v266 = vmul.f32 %v201, %v262
      %v267 = vmul.f32 %v266, %v184
      %v268 = vsub.f32 0.0, %v203
      %v269 = vperm.slane %v206, 1
      %v270 = vmul.f32 %v268, %v269
      %v271 = vmul.f32 %v270, %v188
      %v272 = vadd.f32 %v267, %v271
      %v273 = vmul.f32 %v202, %v269
      %v274 = vmul.f32 %v273, %v188
      %v275 = vsub.f32 0.0, %v204
      %v276 = vperm.slane %v206, 2
      %v277 = vmul.f32 %v275, %v276
      %v278 = vmul.f32 %v277, %v192
      %v279 = vadd.f32 %v274, %v278
      %v280 = vperm.slane %v206, 3
      %v281 = vmul.f32 %v193, %v280
      %v282 = vmul.f32 %v281, %v216
      %v283 = vperm.slane %v206, 4
      %v284 = vmul.f32 %v219, %v283
      %v285 = vmul.f32 %v284, %v223
      %v286 = vadd.f32 %v282, %v285
      %v287 = vmul.f32 %v194, %v283
      %v288 = vmul.f32 %v287, %v223
      %v289 = vperm.slane %v206, 5
      %v290 = vmul.f32 %v226, %v289
      %v291 = vmul.f32 %v290, %v230
      %v292 = vadd.f32 %v288, %v291
      %v293 = vmul.f32 %v195, %v289
      %v294 = vmul.f32 %v293, %v230
      %v295 = vperm.slane %v206, 6
      %v296 = vmul.f32 %v233, %v295
      %v297 = vmul.f32 %v296, %v237
      %v298 = vadd.f32 %v294, %v297
      %v299 = vmul.f32 %v196, %v295
      %v300 = vmul.f32 %v299, %v237
      %v301 = vperm.slane %v206, 7
      %v302 = vmul.f32 %v240, %v301
      %v303 = vmul.f32 %v302, %v244
      %v304 = vadd.f32 %v300, %v303
      %v305 = vmul.f32 %v197, %v301
      %v306 = vmul.f32 %v305, %v244
      %v307 = vperm.slane %v207, 0
      %v308 = vmul.f32 %v247, %v307
      %v309 = vmul.f32 %v308, %v251
      %v310 = vadd.f32 %v306, %v309
      %v311 = vmul.f32 %v198, %v307
      %v312 = vmul.f32 %v311, %v251
      %v313 = vperm.slane %v207, 1
      %v314 = vmul.f32 %v254, %v313
      %v315 = vmul.f32 %v314, %v258
      %v316 = vadd.f32 %v312, %v315
      %v317 = vmul.f32 %v199, %v313
      %v318 = vmul.f32 %v317, %v258
      %v319 = vperm.slane %v207, 2
      %v320 = vmul.f32 %v261, %v319
      %v321 = vmul.f32 %v320, %v265
      %v322 = vadd.f32 %v318, %v321
      %v323 = vmul.f32 %v200, %v319
      %v324 = vmul.f32 %v323, %v265
      %v325 = vperm.slane %v207, 3
      %v326 = vmul.f32 %v268, %v325
      %v327 = vmul.f32 %v326, %v272
      %v328 = vadd.f32 %v324, %v327
      %v329 = vmul.f32 %v201, %v325
      %v330 = vmul.f32 %v329, %v272
      %v331 = vperm.slane %v207, 4
      %v332 = vmul.f32 %v275, %v331
      %v333 = vmul.f32 %v332, %v279
      %v334 = vadd.f32 %v330, %v333
      %v335 = vperm.slane %v207, 5
      %v336 = vmul.f32 %v193, %v335
      %v337 = vmul.f32 %v336, %v286
      %v338 = vperm.slane %v207, 6
      %v339 = vmul.f32 %v226, %v338
      %v340 = vmul.f32 %v339, %v292
      %v341 = vadd.f32 %v337, %v340
      %342 = vst [vmem:[#allocation3] sm:$0xff] %v341
      %v343 = vmul.f32 %v194, %v338
      %v344 = vmul.f32 %v343, %v292
      %v345 = vperm.slane %v207, 7
      %v346 = vmul.f32 %v233, %v345
      %v347 = vmul.f32 %v346, %v298
      %v348 = vadd.f32 %v344, %v347
      %349 = vst [vmem:[#allocation3 + $0x8] sm:$0xff] %v348
      %v350 = vmul.f32 %v195, %v345
      %v351 = vmul.f32 %v350, %v298
      %v352 = vperm.slane %v208, 0
      %v353 = vmul.f32 %v240, %v352
      %v354 = vmul.f32 %v353, %v304
      %v355 = vadd.f32 %v351, %v354
      %356 = vst [vmem:[#allocation3 + $0x10] sm:$0xff] %v355
      %v357 = vmul.f32 %v196, %v352
      %v358 = vmul.f32 %v357, %v304
      %v359 = vperm.slane %v208, 1
      %v360 = vmul.f32 %v247, %v359
      %v361 = vmul.f32 %v360, %v310
      %v362 = vadd.f32 %v358, %v361
      %363 = vst [vmem:[#allocation3 + $0x18] sm:$0xff] %v362
      %v364 = vmul.f32 %v197, %v359
      %v365 = vmul.f32 %v364, %v310
      %v366 = vperm.slane %v208, 2
      %v367 = vmul.f32 %v254, %v366
      %v368 = vmul.f32 %v367, %v316
      %v369 = vadd.f32 %v365, %v368
      %370 = vst [vmem:[#allocation3 + $0x20] sm:$0xff] %v369
      %v371 = vmul.f32 %v198, %v366
      %v372 = vmul.f32 %v371, %v316
      %v373 = vperm.slane %v208, 3
      %v374 = vmul.f32 %v261, %v373
      %v375 = vmul.f32 %v374, %v322
      %v376 = vadd.f32 %v372, %v375
      %377 = vst [vmem:[#allocation3 + $0x28] sm:$0xff] %v376
      %v378 = vmul.f32 %v199, %v373
      %v379 = vmul.f32 %v378, %v322
      %v380 = vperm.slane %v208, 4
      %v381 = vmul.f32 %v268, %v380
      %v382 = vmul.f32 %v381, %v328
      %v383 = vadd.f32 %v379, %v382
      %384 = vst [vmem:[#allocation3 + $0x30] sm:$0xff] %v383
      %v385 = vmul.f32 %v200, %v380
      %v386 = vmul.f32 %v385, %v328
      %v387 = vperm.slane %v208, 5
      %v388 = vmul.f32 %v275, %v387
      %v389 = vmul.f32 %v388, %v334
      %v390 = vadd.f32 %v386, %v389
      %391 = vst [vmem:[#allocation3 + $0x38] sm:$0xff] %v390
    $region45: #{tpu_custom_call.1} parent=1 // pred_fallthru
      _
    %v392 = vld [vmem:[#allocation2] sm:$0xff]
    %v393 = vld [vmem:[#allocation10] sm:$0xff]
    %v394 = vld [vmem:[#allocation10 + $0x8] sm:$0xff]
    %v395 = vld [vmem:[#allocation10 + $0x10] sm:$0xff]
    %v396 = vld [vmem:[#allocation10 + $0x18] sm:$0xff]
    %v397 = vld [vmem:[#allocation10 + $0x20] sm:$0xff]
    %v398 = vld [vmem:[#allocation10 + $0x28] sm:$0xff]
    %v399 = vld [vmem:[#allocation10 + $0x30] sm:$0xff]
    %v400 = vld [vmem:[#allocation10 + $0x38] sm:$0xff]
    %v401 = vld [vmem:[#allocation10 + $0x40] sm:$0xff]
    %v402 = vld [vmem:[#allocation10 + $0x48] sm:$0xff]
    %v403 = vld [vmem:[#allocation10 + $0x50] sm:$0xff]
    %v404 = vld [vmem:[#allocation10 + $0x58] sm:$0xff]
    %v405 = vld [vmem:[#allocation10 + $0x60] sm:$0xff]
    %v406 = vld [vmem:[#allocation10 + $0x68] sm:$0xff]
    %v407 = vld [vmem:[#allocation10 + $0x70] sm:$0xff]
    %v408 = vld [vmem:[#allocation10 + $0x78] sm:$0xff]
    %v409 = vld [vmem:[#allocation3] sm:$0xff]
    %v410 = vld [vmem:[#allocation3 + $0x8] sm:$0xff]
    %v411 = vld [vmem:[#allocation3 + $0x10] sm:$0xff]
    %v412 = vld [vmem:[#allocation3 + $0x18] sm:$0xff]
    %v413 = vld [vmem:[#allocation3 + $0x20] sm:$0xff]
    %v414 = vld [vmem:[#allocation3 + $0x28] sm:$0xff]
    %v415 = vld [vmem:[#allocation3 + $0x30] sm:$0xff]
    %v416 = vld [vmem:[#allocation3 + $0x38] sm:$0xff]
    %v417 = vld [vmem:[#allocation12] sm:$0xff]
    %v418 = vld [vmem:[#allocation12 + $0x8] sm:$0xff]
    %v419 = vld [vmem:[#allocation12 + $0x10] sm:$0xff]
    %v420 = vld [vmem:[#allocation12 + $0x18] sm:$0xff]
    %v421 = vld [vmem:[#allocation12 + $0x20] sm:$0xff]
    %v422 = vld [vmem:[#allocation12 + $0x28] sm:$0xff]
    %v423 = vld [vmem:[#allocation12 + $0x30] sm:$0xff]
    %v424 = vld [vmem:[#allocation12 + $0x38] sm:$0xff]
    %v425 = vld [vmem:[#allocation12 + $0x40] sm:$0xff]
    %v426 = vld [vmem:[#allocation12 + $0x48] sm:$0xff]
    %v427 = vld [vmem:[#allocation12 + $0x50] sm:$0xff]
    %v428 = vld [vmem:[#allocation12 + $0x58] sm:$0xff]
    %v429 = vld [vmem:[#allocation12 + $0x60] sm:$0xff]
    %v430 = vld [vmem:[#allocation12 + $0x68] sm:$0xff]
    %v431 = vld [vmem:[#allocation12 + $0x70] sm:$0xff]
    %v432 = vld [vmem:[#allocation12 + $0x78] sm:$0xff]
    %v433 = vld [vmem:[#allocation12 + $0x80] sm:$0xff]
    %v434 = vld [vmem:[#allocation12 + $0x88] sm:$0xff]
    %v435 = vld [vmem:[#allocation12 + $0x90] sm:$0xff]
    %v436 = vld [vmem:[#allocation12 + $0x98] sm:$0xff]
    %v437 = vld [vmem:[#allocation12 + $0xa0] sm:$0xff]
    %v438 = vld [vmem:[#allocation12 + $0xa8] sm:$0xff]
    %v439 = vld [vmem:[#allocation12 + $0xb0] sm:$0xff]
    %v440 = vld [vmem:[#allocation12 + $0xb8] sm:$0xff]
    %v441 = vld [vmem:[#allocation12 + $0xc0] sm:$0xff]
    %v442 = vld [vmem:[#allocation12 + $0xc8] sm:$0xff]
    %v443 = vld [vmem:[#allocation12 + $0xd0] sm:$0xff]
    %v444 = vld [vmem:[#allocation12 + $0xd8] sm:$0xff]
    %v445 = vld [vmem:[#allocation12 + $0xe0] sm:$0xff]
    %v446 = vld [vmem:[#allocation12 + $0xe8] sm:$0xff]
    %v447 = vld [vmem:[#allocation12 + $0xf0] sm:$0xff]
    %v448 = vld [vmem:[#allocation12 + $0xf8] sm:$0xff]
    %v449 = vld [vmem:[#allocation12 + $0x100] sm:$0xff]
    %v450 = vld [vmem:[#allocation12 + $0x108] sm:$0xff]
    %v451 = vld [vmem:[#allocation12 + $0x110] sm:$0xff]
    %v452 = vld [vmem:[#allocation12 + $0x118] sm:$0xff]
    %v453 = vld [vmem:[#allocation12 + $0x120] sm:$0xff]
    %v454 = vld [vmem:[#allocation12 + $0x128] sm:$0xff]
    %v455 = vld [vmem:[#allocation12 + $0x130] sm:$0xff]
    %v456 = vld [vmem:[#allocation12 + $0x138] sm:$0xff]
    %v457 = vld [vmem:[#allocation12 + $0x140] sm:$0xff]
    %v458 = vld [vmem:[#allocation12 + $0x148] sm:$0xff]
    %v459 = vld [vmem:[#allocation12 + $0x150] sm:$0xff]
    %v460 = vld [vmem:[#allocation12 + $0x158] sm:$0xff]
    %v461 = vld [vmem:[#allocation12 + $0x160] sm:$0xff]
    %v462 = vld [vmem:[#allocation12 + $0x168] sm:$0xff]
    %v463 = vld [vmem:[#allocation12 + $0x170] sm:$0xff]
    %v464 = vld [vmem:[#allocation12 + $0x178] sm:$0xff]
    %v465 = vld [vmem:[#allocation12 + $0x180] sm:$0xff]
    %v466 = vld [vmem:[#allocation12 + $0x188] sm:$0xff]
    %v467 = vld [vmem:[#allocation12 + $0x190] sm:$0xff]
    %v468 = vld [vmem:[#allocation12 + $0x198] sm:$0xff]
    %v469 = vld [vmem:[#allocation12 + $0x1a0] sm:$0xff]
    %v470 = vld [vmem:[#allocation12 + $0x1a8] sm:$0xff]
    %v471 = vld [vmem:[#allocation12 + $0x1b0] sm:$0xff]
    %v472 = vld [vmem:[#allocation12 + $0x1b8] sm:$0xff]
    %v473 = vld [vmem:[#allocation12 + $0x1c0] sm:$0xff]
    %v474 = vld [vmem:[#allocation12 + $0x1c8] sm:$0xff]
    %v475 = vld [vmem:[#allocation12 + $0x1d0] sm:$0xff]
    %v476 = vld [vmem:[#allocation12 + $0x1d8] sm:$0xff]
    %v477 = vld [vmem:[#allocation12 + $0x1e0] sm:$0xff]
    %v478 = vld [vmem:[#allocation12 + $0x1e8] sm:$0xff]
    %v479 = vld [vmem:[#allocation12 + $0x1f0] sm:$0xff]
    %v480 = vld [vmem:[#allocation12 + $0x1f8] sm:$0xff]
    %v481 = vld [vmem:[#allocation12 + $0x200] sm:$0xff]
    %v482 = vld [vmem:[#allocation12 + $0x208] sm:$0xff]
    %v483 = vld [vmem:[#allocation12 + $0x210] sm:$0xff]
    %v484 = vld [vmem:[#allocation12 + $0x218] sm:$0xff]
    %v485 = vld [vmem:[#allocation12 + $0x220] sm:$0xff]
    %v486 = vld [vmem:[#allocation12 + $0x228] sm:$0xff]
    %v487 = vld [vmem:[#allocation12 + $0x230] sm:$0xff]
    %v488 = vld [vmem:[#allocation12 + $0x238] sm:$0xff]
    %v489 = vld [vmem:[#allocation12 + $0x240] sm:$0xff]
    %v490 = vld [vmem:[#allocation12 + $0x248] sm:$0xff]
    %v491 = vld [vmem:[#allocation12 + $0x250] sm:$0xff]
    %v492 = vld [vmem:[#allocation12 + $0x258] sm:$0xff]
    %v493 = vld [vmem:[#allocation12 + $0x260] sm:$0xff]
    %v494 = vld [vmem:[#allocation12 + $0x268] sm:$0xff]
    %v495 = vld [vmem:[#allocation12 + $0x270] sm:$0xff]
    %v496 = vld [vmem:[#allocation12 + $0x278] sm:$0xff]
    %v497 = vld [vmem:[#allocation12 + $0x280] sm:$0xff]
    %v498 = vld [vmem:[#allocation12 + $0x288] sm:$0xff]
    %v499 = vld [vmem:[#allocation12 + $0x290] sm:$0xff]
    %v500 = vld [vmem:[#allocation12 + $0x298] sm:$0xff]
    %v501 = vld [vmem:[#allocation12 + $0x2a0] sm:$0xff]
    %v502 = vld [vmem:[#allocation12 + $0x2a8] sm:$0xff]
    %v503 = vld [vmem:[#allocation12 + $0x2b0] sm:$0xff]
    %v504 = vld [vmem:[#allocation12 + $0x2b8] sm:$0xff]
    %v505 = vld [vmem:[#allocation12 + $0x2c0] sm:$0xff]
    %v506 = vld [vmem:[#allocation12 + $0x2c8] sm:$0xff]
    %v507 = vld [vmem:[#allocation12 + $0x2d0] sm:$0xff]
    %v508 = vld [vmem:[#allocation12 + $0x2d8] sm:$0xff]
    %v509 = vld [vmem:[#allocation12 + $0x2e0] sm:$0xff]
    %v510 = vld [vmem:[#allocation12 + $0x2e8] sm:$0xff]
    %v511 = vld [vmem:[#allocation12 + $0x2f0] sm:$0xff]
    %v512 = vld [vmem:[#allocation12 + $0x2f8] sm:$0xff]
    %v513 = vld [vmem:[#allocation12 + $0x300] sm:$0xff]
    %v514 = vld [vmem:[#allocation12 + $0x308] sm:$0xff]
    %v515 = vld [vmem:[#allocation12 + $0x310] sm:$0xff]
    %v516 = vld [vmem:[#allocation12 + $0x318] sm:$0xff]
    %v517 = vld [vmem:[#allocation12 + $0x320] sm:$0xff]
    %v518 = vld [vmem:[#allocation12 + $0x328] sm:$0xff]
    %v519 = vld [vmem:[#allocation12 + $0x330] sm:$0xff]
    %v520 = vld [vmem:[#allocation12 + $0x338] sm:$0xff]
    %v521 = vld [vmem:[#allocation12 + $0x340] sm:$0xff]
    %v522 = vld [vmem:[#allocation12 + $0x348] sm:$0xff]
    %v523 = vld [vmem:[#allocation12 + $0x350] sm:$0xff]
    %v524 = vld [vmem:[#allocation12 + $0x358] sm:$0xff]
    %v525 = vld [vmem:[#allocation12 + $0x360] sm:$0xff]
    %v526 = vld [vmem:[#allocation12 + $0x368] sm:$0xff]
    %v527 = vld [vmem:[#allocation12 + $0x370] sm:$0xff]
    %v528 = vld [vmem:[#allocation12 + $0x378] sm:$0xff]
    %v529 = vld [vmem:[#allocation12 + $0x380] sm:$0xff]
    %v530 = vld [vmem:[#allocation12 + $0x388] sm:$0xff]
    %v531 = vld [vmem:[#allocation12 + $0x390] sm:$0xff]
    %v532 = vld [vmem:[#allocation12 + $0x398] sm:$0xff]
    %v533 = vld [vmem:[#allocation12 + $0x3a0] sm:$0xff]
    %v534 = vld [vmem:[#allocation12 + $0x3a8] sm:$0xff]
    %v535 = vld [vmem:[#allocation12 + $0x3b0] sm:$0xff]
    %v536 = vld [vmem:[#allocation12 + $0x3b8] sm:$0xff]
    %v537 = vld [vmem:[#allocation12 + $0x3c0] sm:$0xff]
    %v538 = vld [vmem:[#allocation12 + $0x3c8] sm:$0xff]
    %v539 = vld [vmem:[#allocation12 + $0x3d0] sm:$0xff]
    %v540 = vld [vmem:[#allocation12 + $0x3d8] sm:$0xff]
    %v541 = vld [vmem:[#allocation12 + $0x3e0] sm:$0xff]
    %v542 = vld [vmem:[#allocation12 + $0x3e8] sm:$0xff]
    %v543 = vld [vmem:[#allocation12 + $0x3f0] sm:$0xff]
    %v544 = vld [vmem:[#allocation12 + $0x3f8] sm:$0xff]
    %545 = vmatpush.xpose.msra.mxu0 %v537
    %546 = vmatpush.xpose.msra.mxu0 %v529
    %547 = vmatpush.xpose.msra.mxu0 %v521
    %548 = vmatpush.xpose.msra.mxu0 %v513
    %549 = vmatpush.xpose.msra.mxu0 %v505
    %550 = vmatpush.xpose.msra.mxu0 %v497
    %551 = vmatpush.xpose.msra.mxu0 %v489
    %552 = vmatpush.xpose.msra.mxu0 %v481
    %553 = vmatpush.xpose.msra.mxu0 %v473
    %554 = vmatpush.xpose.msra.mxu0 %v465
    %555 = vmatpush.xpose.msra.mxu0 %v457
    %556 = vmatpush.xpose.msra.mxu0 %v449
    %557 = vmatpush.xpose.msra.mxu0 %v441
    %558 = vmatpush.xpose.msra.mxu0 %v433
    %559 = vmatpush.xpose.msra.mxu0 %v425
    %560 = vmatpush.xpose.msra.mxu0 %v417
    %561 = vmatmul.f32.gmra.mxu0 %v409
    %v562 = vpop.f32.mrf.mxu0
    %v563 = vadd.f32 0.0, %v562
    %564 = vdwg.mxu0
    %565 = vmatpush.xpose.msra.mxu0 %v538
    %566 = vmatpush.xpose.msra.mxu0 %v530
    %567 = vmatpush.xpose.msra.mxu0 %v522
    %568 = vmatpush.xpose.msra.mxu0 %v514
    %569 = vmatpush.xpose.msra.mxu0 %v506
    %570 = vmatpush.xpose.msra.mxu0 %v498
    %571 = vmatpush.xpose.msra.mxu0 %v490
    %572 = vmatpush.xpose.msra.mxu0 %v482
    %573 = vmatpush.xpose.msra.mxu0 %v474
    %574 = vmatpush.xpose.msra.mxu0 %v466
    %575 = vmatpush.xpose.msra.mxu0 %v458
    %576 = vmatpush.xpose.msra.mxu0 %v450
    %577 = vmatpush.xpose.msra.mxu0 %v442
    %578 = vmatpush.xpose.msra.mxu0 %v434
    %579 = vmatpush.xpose.msra.mxu0 %v426
    %580 = vmatpush.xpose.msra.mxu0 %v418
    %581 = vmatmul.f32.gmra.mxu0 %v410
    %v582 = vpop.f32.mrf.mxu0
    %v583 = vadd.f32 %v563, %v582
    %584 = vdwg.mxu0
    %585 = vmatpush.xpose.msra.mxu0 %v539
    %586 = vmatpush.xpose.msra.mxu0 %v531
    %587 = vmatpush.xpose.msra.mxu0 %v523
    %588 = vmatpush.xpose.msra.mxu0 %v515
    %589 = vmatpush.xpose.msra.mxu0 %v507
    %590 = vmatpush.xpose.msra.mxu0 %v499
    %591 = vmatpush.xpose.msra.mxu0 %v491
    %592 = vmatpush.xpose.msra.mxu0 %v483
    %593 = vmatpush.xpose.msra.mxu0 %v475
    %594 = vmatpush.xpose.msra.mxu0 %v467
    %595 = vmatpush.xpose.msra.mxu0 %v459
    %596 = vmatpush.xpose.msra.mxu0 %v451
    %597 = vmatpush.xpose.msra.mxu0 %v443
    %598 = vmatpush.xpose.msra.mxu0 %v435
    %599 = vmatpush.xpose.msra.mxu0 %v427
    %600 = vmatpush.xpose.msra.mxu0 %v419
    %601 = vmatmul.f32.gmra.mxu0 %v411
    %v602 = vpop.f32.mrf.mxu0
    %v603 = vadd.f32 %v583, %v602
    %604 = vdwg.mxu0
    %605 = vmatpush.xpose.msra.mxu0 %v540
    %606 = vmatpush.xpose.msra.mxu0 %v532
    %607 = vmatpush.xpose.msra.mxu0 %v524
    %608 = vmatpush.xpose.msra.mxu0 %v516
    %609 = vmatpush.xpose.msra.mxu0 %v508
    %610 = vmatpush.xpose.msra.mxu0 %v500
    %611 = vmatpush.xpose.msra.mxu0 %v492
    %612 = vmatpush.xpose.msra.mxu0 %v484
    %613 = vmatpush.xpose.msra.mxu0 %v476
    %614 = vmatpush.xpose.msra.mxu0 %v468
    %615 = vmatpush.xpose.msra.mxu0 %v460
    %616 = vmatpush.xpose.msra.mxu0 %v452
    %617 = vmatpush.xpose.msra.mxu0 %v444
    %618 = vmatpush.xpose.msra.mxu0 %v436
    %619 = vmatpush.xpose.msra.mxu0 %v428
    %620 = vmatpush.xpose.msra.mxu0 %v420
    %621 = vmatmul.f32.gmra.mxu0 %v412
    %v622 = vpop.f32.mrf.mxu0
    %v623 = vadd.f32 %v603, %v622
    %624 = vdwg.mxu0
    %625 = vmatpush.xpose.msra.mxu0 %v541
    %626 = vmatpush.xpose.msra.mxu0 %v533
    %627 = vmatpush.xpose.msra.mxu0 %v525
    %628 = vmatpush.xpose.msra.mxu0 %v517
    %629 = vmatpush.xpose.msra.mxu0 %v509
    %630 = vmatpush.xpose.msra.mxu0 %v501
    %631 = vmatpush.xpose.msra.mxu0 %v493
    %632 = vmatpush.xpose.msra.mxu0 %v485
    %633 = vmatpush.xpose.msra.mxu0 %v477
    %634 = vmatpush.xpose.msra.mxu0 %v469
    %635 = vmatpush.xpose.msra.mxu0 %v461
    %636 = vmatpush.xpose.msra.mxu0 %v453
    %637 = vmatpush.xpose.msra.mxu0 %v445
    %638 = vmatpush.xpose.msra.mxu0 %v437
    %639 = vmatpush.xpose.msra.mxu0 %v429
    %640 = vmatpush.xpose.msra.mxu0 %v421
    %641 = vmatmul.f32.gmra.mxu0 %v413
    %v642 = vpop.f32.mrf.mxu0
    %v643 = vadd.f32 %v623, %v642
    %644 = vdwg.mxu0
    %645 = vmatpush.xpose.msra.mxu0 %v542
    %646 = vmatpush.xpose.msra.mxu0 %v534
    %647 = vmatpush.xpose.msra.mxu0 %v526
    %648 = vmatpush.xpose.msra.mxu0 %v518
    %649 = vmatpush.xpose.msra.mxu0 %v510
    %650 = vmatpush.xpose.msra.mxu0 %v502
    %651 = vmatpush.xpose.msra.mxu0 %v494
    %652 = vmatpush.xpose.msra.mxu0 %v486
    %653 = vmatpush.xpose.msra.mxu0 %v478
    %654 = vmatpush.xpose.msra.mxu0 %v470
    %655 = vmatpush.xpose.msra.mxu0 %v462
    %656 = vmatpush.xpose.msra.mxu0 %v454
    %657 = vmatpush.xpose.msra.mxu0 %v446
    %658 = vmatpush.xpose.msra.mxu0 %v438
    %659 = vmatpush.xpose.msra.mxu0 %v430
    %660 = vmatpush.xpose.msra.mxu0 %v422
    %661 = vmatmul.f32.gmra.mxu0 %v414
    %v662 = vpop.f32.mrf.mxu0
    %v663 = vadd.f32 %v643, %v662
    %664 = vdwg.mxu0
    %665 = vmatpush.xpose.msra.mxu0 %v543
    %666 = vmatpush.xpose.msra.mxu0 %v535
    %667 = vmatpush.xpose.msra.mxu0 %v527
    %668 = vmatpush.xpose.msra.mxu0 %v519
    %669 = vmatpush.xpose.msra.mxu0 %v511
    %670 = vmatpush.xpose.msra.mxu0 %v503
    %671 = vmatpush.xpose.msra.mxu0 %v495
    %672 = vmatpush.xpose.msra.mxu0 %v487
    %673 = vmatpush.xpose.msra.mxu0 %v479
    %674 = vmatpush.xpose.msra.mxu0 %v471
    %675 = vmatpush.xpose.msra.mxu0 %v463
    %676 = vmatpush.xpose.msra.mxu0 %v455
    %677 = vmatpush.xpose.msra.mxu0 %v447
    %678 = vmatpush.xpose.msra.mxu0 %v439
    %679 = vmatpush.xpose.msra.mxu0 %v431
    %680 = vmatpush.xpose.msra.mxu0 %v423
    %681 = vmatmul.f32.gmra.mxu0 %v415
    %v682 = vpop.f32.mrf.mxu0
    %v683 = vadd.f32 %v663, %v682
    %684 = vdwg.mxu0
    %685 = vmatpush.xpose.msra.mxu0 %v544
    %686 = vmatpush.xpose.msra.mxu0 %v536
    %687 = vmatpush.xpose.msra.mxu0 %v528
    %688 = vmatpush.xpose.msra.mxu0 %v520
    %689 = vmatpush.xpose.msra.mxu0 %v512
    %690 = vmatpush.xpose.msra.mxu0 %v504
    %691 = vmatpush.xpose.msra.mxu0 %v496
    %692 = vmatpush.xpose.msra.mxu0 %v488
    %693 = vmatpush.xpose.msra.mxu0 %v480
    %694 = vmatpush.xpose.msra.mxu0 %v472
    %695 = vmatpush.xpose.msra.mxu0 %v464
    %696 = vmatpush.xpose.msra.mxu0 %v456
    %697 = vmatpush.xpose.msra.mxu0 %v448
    %698 = vmatpush.xpose.msra.mxu0 %v440
    %699 = vmatpush.xpose.msra.mxu0 %v432
    %700 = vmatpush.xpose.msra.mxu0 %v424
    %701 = vmatmul.f32.gmra.mxu0 %v416
    %v702 = vpop.f32.mrf.mxu0
    %v703 = vadd.f32 %v683, %v702
    %704 = vdwg.mxu0
    %705 = vmatpush.xpose.msra.mxu0 %v408
    %706 = vmatpush.xpose.msra.mxu0 %v407
    %707 = vmatpush.xpose.msra.mxu0 %v406
    %708 = vmatpush.xpose.msra.mxu0 %v405
    %709 = vmatpush.xpose.msra.mxu0 %v404
    %710 = vmatpush.xpose.msra.mxu0 %v403
    %711 = vmatpush.xpose.msra.mxu0 %v402
    %712 = vmatpush.xpose.msra.mxu0 %v401
    %713 = vmatpush.xpose.msra.mxu0 %v400
    %714 = vmatpush.xpose.msra.mxu0 %v399
    %715 = vmatpush.xpose.msra.mxu0 %v398
    %716 = vmatpush.xpose.msra.mxu0 %v397
    %717 = vmatpush.xpose.msra.mxu0 %v396
    %718 = vmatpush.xpose.msra.mxu0 %v395
    %719 = vmatpush.xpose.msra.mxu0 %v394
    %720 = vmatpush.xpose.msra.mxu0 %v393
    %721 = vmatmul.f32.gmra.mxu0 %v392
    %v722 = vpop.f32.mrf.mxu0
    %v723 = vadd.f32 %v703, %v722
    %724 = vdwg.mxu0
    %725 = vst [vmem:[#allocation13] sm:$0xff] %v723
    // Predicated region
    $region46: #{tpu_custom_call.1} parent=1 // pred_check
      _
    $region47: #{tpu_custom_call.1} parent=1 // pred_check_branch
      %727 = sbr.rel (0) target = $region49
    $region48: #{tpu_custom_call.1} parent=1 // pred_region
      %729 = vsyncadd [#allocation6], 0
      %s731 = sshll.u32 [#allocation13], 4
      %s732 = int_to_ptr.vmem [resolvable:$true] %s731
      %s733 = sshll.u32 %s5, 4
      %s734 = int_to_ptr.hbm [resolvable:$true] %s733
      %736 = dma.vmem_to_hbm [thread:$0]  %s732, 128, %s734, [#allocation6]
    $region49: #{tpu_custom_call.1} parent=1 // pred_fallthru
      _
    // Predicated region
    $region50: #{tpu_custom_call.1} parent=1 // pred_check
      _
    $region51: #{tpu_custom_call.1} parent=1 // pred_check_branch
      %738 = sbr.rel (0) target = $region53
    $region52: #{tpu_custom_call.1} parent=1 // pred_region
      %740 = dma.done [#allocation6], 128
    $region53: #{tpu_custom_call.1} parent=1 // pred_fallthru
      _
    %741 = vsyncpa [#allocation5], 1
    %742 = vsyncpa [#allocation8], 1
    %743 = vsyncpa [#allocation11], 1
    %744 = vsyncpa [#allocation6], 1

</llo_original>
